<compile_context>
chip_gen: v7x
topology: tpu7x:2x2x1
jax: 0.10.0
libtpu: 0.0.40
codegen_flags: <defaults>
</compile_context>

<pallas_src>
import math
import functools

import jax
import jax.numpy as jnp
from jax.experimental import pallas as pl
from jax.experimental.pallas import tpu as pltpu

D_MODEL = 64
NUM_HEADS = 4
DIM_FF = 4 * D_MODEL
LN_EPS = 1e-5  # PyTorch nn.LayerNorm default


def _layernorm(x, gamma, beta, eps=LN_EPS):
    mean = jnp.mean(x, axis=-1, keepdims=True)
    var = jnp.mean((x - mean) ** 2, axis=-1, keepdims=True)
    return (x - mean) * jax.lax.rsqrt(var + eps) * gamma + beta


def encoder_layer_kernel(
    src_ref, mask_ref,
    wqkv_ref, bqkv_ref, wo_ref, w1_ref, b1_ref, w2_ref, vec_ref,
    out_ref,
    *, num_heads, compute_dtype,
):
    Bb, T, D = src_ref.shape
    H = num_heads
    hd = D // H
    inv_scale = 1.0 / math.sqrt(hd)
    cd = compute_dtype

    x = src_ref[...].reshape(Bb * T, D)          # (M, D) f32 slab, M = Bb*T
    m = mask_ref[...]                            # (T, T) additive mask

    # ---- unpack small packed parameters (static slices: free) -----------
    vecs = vec_ref[...]                          # (8, D)
    b_o, b_2 = vecs[0:1], vecs[1:2]
    g1, beta1 = vecs[2:3], vecs[3:4]
    g2, beta2 = vecs[4:5], vecs[5:6]

    # ---- fused QKV projection: one (M, D) x (D, 3D) matmul ---------------
    qkv = jnp.dot(x.astype(cd), wqkv_ref[...].astype(cd),
                  preferred_element_type=jnp.float32) + bqkv_ref[...]
    q = qkv[:, :D].reshape(Bb, T, D) * inv_scale   # scale folded into q once
    k = qkv[:, D:2 * D].reshape(Bb, T, D)
    v = qkv[:, 2 * D:].reshape(Bb, T, D)

    # ---- head-major batched attention: batch dim = H * Bb ----------------
    def split_heads(z):                           # (Bb, T, D) -> (H*Bb, T, hd)
        return jnp.concatenate(
            [z[:, :, h * hd:(h + 1) * hd] for h in range(H)], axis=0)

    qh, kh, vh = split_heads(q), split_heads(k), split_heads(v)

    s = jnp.einsum('btd,bsd->bts', qh.astype(cd), kh.astype(cd),
                   preferred_element_type=jnp.float32)        # (H*Bb, T, T)
    s = s + m[None, :, :]                                     # additive mask
    s = s - jnp.max(s, axis=-1, keepdims=True)                # stable softmax
    e = jnp.exp(s)
    p = e * pl.reciprocal(jnp.sum(e, axis=-1, keepdims=True), approx=True)
    oh = jnp.einsum('bts,bsd->btd', p.astype(cd), vh.astype(cd),
                    preferred_element_type=jnp.float32)       # (H*Bb, T, hd)

    # merge heads back along lanes: (H*Bb, T, hd) -> (Bb, T, D) -> (M, D)
    attn = jnp.concatenate([oh[h * Bb:(h + 1) * Bb] for h in range(H)], axis=-1)
    attn = attn.reshape(Bb * T, D)
    attn_out = jnp.dot(attn.astype(cd), wo_ref[...].astype(cd),
                       preferred_element_type=jnp.float32) + b_o

    # ---- residual + LayerNorm 1 (f32) ------------------------------------
    x1 = _layernorm(x + attn_out, g1, beta1)

    # ---- feed-forward ----------------------------------------------------
    hid = jnp.dot(x1.astype(cd), w1_ref[...].astype(cd),
                  preferred_element_type=jnp.float32) + b1_ref[...]
    hid = jnp.maximum(hid, 0.0)                                # ReLU
    ff = jnp.dot(hid.astype(cd), w2_ref[...].astype(cd),
                 preferred_element_type=jnp.float32) + b_2

    # ---- residual + LayerNorm 2 (f32) ------------------------------------
    x2 = _layernorm(x1 + ff, g2, beta2)

    out_ref[...] = x2.reshape(Bb, T, D)


def _replicated_spec(a):
    nd = a.ndim

    def idx(b):
        return (0,) * nd

    return pl.BlockSpec(a.shape, idx)


def transformer_encoder_layer(src, mask, params, *, compute_dtype=jnp.float32):
    """src: (B, T, D) f32; mask: (T, T) additive f32 mask (zeros == no mask)."""
    B, T, D = src.shape

    # Fewest grid steps (v5e/v6e are single-TC -> extra steps are pure
    # overhead), but split batch in two when it is big enough so v7x's two
    # TensorCores both get a "parallel" step.
    nb = 2 if (B >= 4 and B % 2 == 0) else 1
    b_blk = B // nb

    # ---- pack parameters into few, larger arrays --------------------------
    w_qkv = jnp.concatenate([params["wq"], params["wk"], params["wv"]], axis=1)
    b_qkv = jnp.concatenate([params["bq"], params["bk"], params["bv"]], axis=1)
    vecs = jnp.concatenate(
        [params["bo"], params["b2"], params["g1"], params["beta1"],
         params["g2"], params["beta2"], jnp.zeros((2, D), jnp.float32)],
        axis=0)                                               # (8, D)

    inputs = [src, mask, w_qkv, b_qkv, params["wo"],
              params["w1"], params["b1"], params["w2"], vecs]

    in_specs = ([pl.BlockSpec((b_blk, T, D), lambda b: (b, 0, 0))]
                + [_replicated_spec(a) for a in inputs[1:]])
    out_spec = pl.BlockSpec((b_blk, T, D), lambda b: (b, 0, 0))

    kernel = functools.partial(encoder_layer_kernel,
                               num_heads=NUM_HEADS,
                               compute_dtype=compute_dtype)

    return pl.pallas_call(
        kernel,
        out_shape=jax.ShapeDtypeStruct((B, T, D), jnp.float32),
        grid_spec=pltpu.PrefetchScalarGridSpec(
            num_scalar_prefetch=0,
            grid=(nb,),
            in_specs=in_specs,
            out_specs=out_spec,
        ),
        compiler_params=pltpu.CompilerParams(
            dimension_semantics=("parallel",)),
    )(*inputs)


# -------------------- pure-JAX reference (for validation) --------------------
def reference_forward(src, mask, p):
    B, T, D = src.shape
    H, hd = NUM_HEADS, D // NUM_HEADS
    q = src @ p["wq"] + p["bq"]
    k = src @ p["wk"] + p["bk"]
    v = src @ p["wv"] + p["bv"]
    q = q.reshape(B, T, H, hd).transpose(0, 2, 1, 3)
    k = k.reshape(B, T, H, hd).transpose(0, 2, 1, 3)
    v = v.reshape(B, T, H, hd).transpose(0, 2, 1, 3)
    s = jnp.einsum("bhqd,bhkd->bhqk", q, k) / math.sqrt(hd) + mask[None, None]
    w = jax.nn.softmax(s, axis=-1)
    a = jnp.einsum("bhqk,bhkd->bhqd", w, v).transpose(0, 2, 1, 3).reshape(B, T, D)
    a = a @ p["wo"] + p["bo"]
    x1 = _layernorm(src + a, p["g1"], p["beta1"])
    ff = jnp.maximum(x1 @ p["w1"] + p["b1"], 0.0) @ p["w2"] + p["b2"]
    return _layernorm(x1 + ff, p["g2"], p["beta2"])


def make_params(key):
    ks = jax.random.split(key, 8)

    def lin(k, fan_in, fan_out):
        return (0.02 * jax.random.normal(k, (fan_in, fan_out), jnp.float32),
                jnp.zeros((1, fan_out), jnp.float32))

    wq, bq = lin(ks[0], D_MODEL, D_MODEL)
    wk, bk = lin(ks[1], D_MODEL, D_MODEL)
    wv, bv = lin(ks[2], D_MODEL, D_MODEL)
    wo, bo = lin(ks[3], D_MODEL, D_MODEL)
    w1, b1 = lin(ks[4], D_MODEL, DIM_FF)
    w2, b2 = lin(ks[5], DIM_FF, D_MODEL)
    return dict(
        wq=wq, bq=bq, wk=wk, bk=bk, wv=wv, bv=bv, wo=wo, bo=bo,
        w1=w1, b1=b1, w2=w2, b2=b2,
        g1=jnp.ones((1, D_MODEL), jnp.float32),
        beta1=jnp.zeros((1, D_MODEL), jnp.float32),
        g2=jnp.ones((1, D_MODEL), jnp.float32),
        beta2=jnp.zeros((1, D_MODEL), jnp.float32),
    )


if __name__ == "__main__":
    key = jax.random.PRNGKey(0)
    k_src, k_par = jax.random.split(key)

    B, T = 2, 8
    src = jax.random.normal(k_src, (B, T, D_MODEL), jnp.float32)
    mask = jnp.zeros((T, T), jnp.float32)   # additive zero mask == mask=None
    params = make_params(k_par)

    out = transformer_encoder_layer(src, mask, params)
    out = jax.block_until_ready(out)

    ref = reference_forward(src, mask, params)
    assert out.shape == (B, T, D_MODEL)
    # slightly relaxed tolerance: softmax denominator uses the EUP approximate
    # reciprocal (pl.reciprocal(approx=True)).
    assert jnp.allclose(out, ref, atol=2e-3, rtol=2e-3), "mismatch vs reference"

    print("KERNEL_OK")
</pallas_src>

<mosaic_0001>
module attributes {stable_mosaic.version = 11 : i64} {
  func.func @encoder_layer_kernel(%arg0: i32, %arg1: memref<2x8x64xf32, #tpu.memory_space<vmem>>, %arg2: memref<8x8xf32, #tpu.memory_space<vmem>>, %arg3: memref<64x192xf32, #tpu.memory_space<vmem>>, %arg4: memref<1x192xf32, #tpu.memory_space<vmem>>, %arg5: memref<64x64xf32, #tpu.memory_space<vmem>>, %arg6: memref<64x256xf32, #tpu.memory_space<vmem>>, %arg7: memref<1x256xf32, #tpu.memory_space<vmem>>, %arg8: memref<256x64xf32, #tpu.memory_space<vmem>>, %arg9: memref<8x64xf32, #tpu.memory_space<vmem>>, %arg10: memref<2x8x64xf32, #tpu.memory_space<vmem>>) attributes {dimension_semantics = [#tpu.dimension_semantics<parallel>], iteration_bounds = array<i64: 1>, scalar_prefetch = 0 : i64, scratch_operands = 0 : i64, tpu.core_type = #tpu.core_type<tc>, window_params = [{transform_indices = @transform_0, window_bounds = array<i64: 2, 8, 64>}, {pipeline_mode = #tpu.pipeline_mode<synchronous>, transform_indices = @transform_1, window_bounds = array<i64: 8, 8>}, {pipeline_mode = #tpu.pipeline_mode<synchronous>, transform_indices = @transform_2, window_bounds = array<i64: 64, 192>}, {pipeline_mode = #tpu.pipeline_mode<synchronous>, transform_indices = @transform_3, window_bounds = array<i64: 1, 192>}, {pipeline_mode = #tpu.pipeline_mode<synchronous>, transform_indices = @transform_4, window_bounds = array<i64: 64, 64>}, {pipeline_mode = #tpu.pipeline_mode<synchronous>, transform_indices = @transform_5, window_bounds = array<i64: 64, 256>}, {pipeline_mode = #tpu.pipeline_mode<synchronous>, transform_indices = @transform_6, window_bounds = array<i64: 1, 256>}, {pipeline_mode = #tpu.pipeline_mode<synchronous>, transform_indices = @transform_7, window_bounds = array<i64: 256, 64>}, {pipeline_mode = #tpu.pipeline_mode<synchronous>, transform_indices = @transform_8, window_bounds = array<i64: 8, 64>}, {transform_indices = @transform_9, window_bounds = array<i64: 2, 8, 64>}]} {
    %c0 = arith.constant 0 : index
    %c0_0 = arith.constant 0 : index
    %c0_1 = arith.constant 0 : index
    %0 = vector.load %arg1[%c0, %c0_0, %c0_1] : memref<2x8x64xf32, #tpu.memory_space<vmem>>, vector<2x8x64xf32>
    %1 = vector.shape_cast %0 : vector<2x8x64xf32> to vector<16x64xf32>
    %c0_2 = arith.constant 0 : index
    %c0_3 = arith.constant 0 : index
    %2 = vector.load %arg2[%c0_2, %c0_3] : memref<8x8xf32, #tpu.memory_space<vmem>>, vector<8x8xf32>
    %c0_4 = arith.constant 0 : index
    %c0_5 = arith.constant 0 : index
    %3 = vector.load %arg9[%c0_4, %c0_5] : memref<8x64xf32, #tpu.memory_space<vmem>>, vector<8x64xf32>
    %4 = vector.extract_strided_slice %3 {offsets = [0, 0], sizes = [1, 64], strides = [1, 1]} : vector<8x64xf32> to vector<1x64xf32>
    %5 = vector.extract_strided_slice %3 {offsets = [1, 0], sizes = [1, 64], strides = [1, 1]} : vector<8x64xf32> to vector<1x64xf32>
    %6 = vector.extract_strided_slice %3 {offsets = [2, 0], sizes = [1, 64], strides = [1, 1]} : vector<8x64xf32> to vector<1x64xf32>
    %7 = vector.extract_strided_slice %3 {offsets = [3, 0], sizes = [1, 64], strides = [1, 1]} : vector<8x64xf32> to vector<1x64xf32>
    %8 = vector.extract_strided_slice %3 {offsets = [4, 0], sizes = [1, 64], strides = [1, 1]} : vector<8x64xf32> to vector<1x64xf32>
    %9 = vector.extract_strided_slice %3 {offsets = [5, 0], sizes = [1, 64], strides = [1, 1]} : vector<8x64xf32> to vector<1x64xf32>
    %c0_6 = arith.constant 0 : index
    %c0_7 = arith.constant 0 : index
    %10 = vector.load %arg3[%c0_6, %c0_7] : memref<64x192xf32, #tpu.memory_space<vmem>>, vector<64x192xf32>
    %cst = arith.constant dense<0.000000e+00> : vector<16x192xf32>
    %11 = tpu.matmul %1, %10, %cst {dimension_numbers = #tpu.dot_dimension_numbers<[1], [0], [0], [1], [0, 0, 1, 1], [], []>} : vector<16x64xf32>, vector<64x192xf32>, vector<16x192xf32> -> vector<16x192xf32>
    %c0_8 = arith.constant 0 : index
    %c0_9 = arith.constant 0 : index
    %12 = vector.load %arg4[%c0_8, %c0_9] : memref<1x192xf32, #tpu.memory_space<vmem>>, vector<1x192xf32>
    %13 = vector.broadcast %12 : vector<1x192xf32> to vector<16x192xf32>
    %14 = arith.addf %11, %13 : vector<16x192xf32>
    %15 = vector.extract_strided_slice %14 {offsets = [0, 0], sizes = [16, 64], strides = [1, 1]} : vector<16x192xf32> to vector<16x64xf32>
    %16 = vector.shape_cast %15 : vector<16x64xf32> to vector<2x8x64xf32>
    %cst_10 = arith.constant 2.500000e-01 : f32
    %17 = vector.broadcast %cst_10 : f32 to vector<2x8x64xf32>
    %18 = arith.mulf %16, %17 : vector<2x8x64xf32>
    %19 = vector.extract_strided_slice %14 {offsets = [0, 64], sizes = [16, 64], strides = [1, 1]} : vector<16x192xf32> to vector<16x64xf32>
    %20 = vector.shape_cast %19 : vector<16x64xf32> to vector<2x8x64xf32>
    %21 = vector.extract_strided_slice %14 {offsets = [0, 128], sizes = [16, 64], strides = [1, 1]} : vector<16x192xf32> to vector<16x64xf32>
    %22 = vector.shape_cast %21 : vector<16x64xf32> to vector<2x8x64xf32>
    %23 = vector.extract_strided_slice %18 {offsets = [0, 0, 0], sizes = [2, 8, 16], strides = [1, 1, 1]} : vector<2x8x64xf32> to vector<2x8x16xf32>
    %24 = vector.extract_strided_slice %18 {offsets = [0, 0, 16], sizes = [2, 8, 16], strides = [1, 1, 1]} : vector<2x8x64xf32> to vector<2x8x16xf32>
    %25 = vector.extract_strided_slice %18 {offsets = [0, 0, 32], sizes = [2, 8, 16], strides = [1, 1, 1]} : vector<2x8x64xf32> to vector<2x8x16xf32>
    %26 = vector.extract_strided_slice %18 {offsets = [0, 0, 48], sizes = [2, 8, 16], strides = [1, 1, 1]} : vector<2x8x64xf32> to vector<2x8x16xf32>
    %27 = tpu.concatenate %23, %24, %25, %26 in 0 : vector<2x8x16xf32>, vector<2x8x16xf32>, vector<2x8x16xf32>, vector<2x8x16xf32> -> vector<8x8x16xf32>
    %28 = vector.extract_strided_slice %20 {offsets = [0, 0, 0], sizes = [2, 8, 16], strides = [1, 1, 1]} : vector<2x8x64xf32> to vector<2x8x16xf32>
    %29 = vector.extract_strided_slice %20 {offsets = [0, 0, 16], sizes = [2, 8, 16], strides = [1, 1, 1]} : vector<2x8x64xf32> to vector<2x8x16xf32>
    %30 = vector.extract_strided_slice %20 {offsets = [0, 0, 32], sizes = [2, 8, 16], strides = [1, 1, 1]} : vector<2x8x64xf32> to vector<2x8x16xf32>
    %31 = vector.extract_strided_slice %20 {offsets = [0, 0, 48], sizes = [2, 8, 16], strides = [1, 1, 1]} : vector<2x8x64xf32> to vector<2x8x16xf32>
    %32 = tpu.concatenate %28, %29, %30, %31 in 0 : vector<2x8x16xf32>, vector<2x8x16xf32>, vector<2x8x16xf32>, vector<2x8x16xf32> -> vector<8x8x16xf32>
    %33 = vector.extract_strided_slice %22 {offsets = [0, 0, 0], sizes = [2, 8, 16], strides = [1, 1, 1]} : vector<2x8x64xf32> to vector<2x8x16xf32>
    %34 = vector.extract_strided_slice %22 {offsets = [0, 0, 16], sizes = [2, 8, 16], strides = [1, 1, 1]} : vector<2x8x64xf32> to vector<2x8x16xf32>
    %35 = vector.extract_strided_slice %22 {offsets = [0, 0, 32], sizes = [2, 8, 16], strides = [1, 1, 1]} : vector<2x8x64xf32> to vector<2x8x16xf32>
    %36 = vector.extract_strided_slice %22 {offsets = [0, 0, 48], sizes = [2, 8, 16], strides = [1, 1, 1]} : vector<2x8x64xf32> to vector<2x8x16xf32>
    %37 = tpu.concatenate %33, %34, %35, %36 in 0 : vector<2x8x16xf32>, vector<2x8x16xf32>, vector<2x8x16xf32>, vector<2x8x16xf32> -> vector<8x8x16xf32>
    "tpu.trace_start"() <{level = 10 : i32, message = "btd,bsd->bts"}> : () -> ()
    %cst_11 = arith.constant dense<0.000000e+00> : vector<8x8x8xf32>
    %38 = tpu.matmul %27, %32, %cst_11 {dimension_numbers = #tpu.dot_dimension_numbers<[2], [2], [1], [1], [0, 0, 0, 1, 1, 1], [0], [0]>} : vector<8x8x16xf32>, vector<8x8x16xf32>, vector<8x8x8xf32> -> vector<8x8x8xf32>
    "tpu.trace_stop"() : () -> ()
    %39 = vector.shape_cast %2 : vector<8x8xf32> to vector<1x8x8xf32>
    %40 = vector.broadcast %39 : vector<1x8x8xf32> to vector<8x8x8xf32>
    %41 = arith.addf %38, %40 : vector<8x8x8xf32>
    %cst_12 = arith.constant dense<0xFF800000> : vector<8x8xf32>
    %42 = vector.multi_reduction <maximumf>, %41, %cst_12 [2] : vector<8x8x8xf32> to vector<8x8xf32>
    %43 = vector.shape_cast %42 : vector<8x8xf32> to vector<8x8x1xf32>
    %44 = vector.broadcast %43 : vector<8x8x1xf32> to vector<8x8x8xf32>
    %45 = arith.subf %41, %44 : vector<8x8x8xf32>
    %46 = math.exp %45 : vector<8x8x8xf32>
    %cst_13 = arith.constant dense<0.000000e+00> : vector<8x8xf32>
    %47 = vector.multi_reduction <add>, %46, %cst_13 [2] : vector<8x8x8xf32> to vector<8x8xf32>
    %48 = vector.shape_cast %47 : vector<8x8xf32> to vector<8x8x1xf32>
    %49 = tpu.reciprocal %48 {approx = true} : vector<8x8x1xf32> -> vector<8x8x1xf32>
    %50 = vector.broadcast %49 : vector<8x8x1xf32> to vector<8x8x8xf32>
    %51 = arith.mulf %46, %50 : vector<8x8x8xf32>
    "tpu.trace_start"() <{level = 10 : i32, message = "bts,bsd->btd"}> : () -> ()
    %cst_14 = arith.constant dense<0.000000e+00> : vector<8x8x16xf32>
    %52 = tpu.matmul %51, %37, %cst_14 {dimension_numbers = #tpu.dot_dimension_numbers<[2], [1], [1], [2], [0, 0, 0, 1, 1, 2], [0], [0]>} : vector<8x8x8xf32>, vector<8x8x16xf32>, vector<8x8x16xf32> -> vector<8x8x16xf32>
    "tpu.trace_stop"() : () -> ()
    %53 = vector.extract_strided_slice %52 {offsets = [0, 0, 0], sizes = [2, 8, 16], strides = [1, 1, 1]} : vector<8x8x16xf32> to vector<2x8x16xf32>
    %54 = vector.extract_strided_slice %52 {offsets = [2, 0, 0], sizes = [2, 8, 16], strides = [1, 1, 1]} : vector<8x8x16xf32> to vector<2x8x16xf32>
    %55 = vector.extract_strided_slice %52 {offsets = [4, 0, 0], sizes = [2, 8, 16], strides = [1, 1, 1]} : vector<8x8x16xf32> to vector<2x8x16xf32>
    %56 = vector.extract_strided_slice %52 {offsets = [6, 0, 0], sizes = [2, 8, 16], strides = [1, 1, 1]} : vector<8x8x16xf32> to vector<2x8x16xf32>
    %57 = tpu.concatenate %53, %54, %55, %56 in 2 : vector<2x8x16xf32>, vector<2x8x16xf32>, vector<2x8x16xf32>, vector<2x8x16xf32> -> vector<2x8x64xf32>
    %58 = vector.shape_cast %57 : vector<2x8x64xf32> to vector<16x64xf32>
    %c0_15 = arith.constant 0 : index
    %c0_16 = arith.constant 0 : index
    %59 = vector.load %arg5[%c0_15, %c0_16] : memref<64x64xf32, #tpu.memory_space<vmem>>, vector<64x64xf32>
    %cst_17 = arith.constant dense<0.000000e+00> : vector<16x64xf32>
    %60 = tpu.matmul %58, %59, %cst_17 {dimension_numbers = #tpu.dot_dimension_numbers<[1], [0], [0], [1], [0, 0, 1, 1], [], []>} : vector<16x64xf32>, vector<64x64xf32>, vector<16x64xf32> -> vector<16x64xf32>
    %61 = vector.broadcast %4 : vector<1x64xf32> to vector<16x64xf32>
    %62 = arith.addf %60, %61 : vector<16x64xf32>
    %63 = arith.addf %1, %62 : vector<16x64xf32>
    %cst_18 = arith.constant dense<0.000000e+00> : vector<16xf32>
    %64 = vector.multi_reduction <add>, %63, %cst_18 [1] : vector<16x64xf32> to vector<16xf32>
    %65 = vector.shape_cast %64 : vector<16xf32> to vector<16x1xf32>
    %cst_19 = arith.constant 6.400000e+01 : f32
    %66 = vector.broadcast %cst_19 : f32 to vector<16x1xf32>
    %67 = arith.divf %65, %66 : vector<16x1xf32>
    %68 = vector.broadcast %67 : vector<16x1xf32> to vector<16x64xf32>
    %69 = arith.subf %63, %68 : vector<16x64xf32>
    %70 = arith.mulf %69, %69 : vector<16x64xf32>
    %cst_20 = arith.constant dense<0.000000e+00> : vector<16xf32>
    %71 = vector.multi_reduction <add>, %70, %cst_20 [1] : vector<16x64xf32> to vector<16xf32>
    %72 = vector.shape_cast %71 : vector<16xf32> to vector<16x1xf32>
    %cst_21 = arith.constant 6.400000e+01 : f32
    %73 = vector.broadcast %cst_21 : f32 to vector<16x1xf32>
    %74 = arith.divf %72, %73 : vector<16x1xf32>
    %75 = vector.broadcast %67 : vector<16x1xf32> to vector<16x64xf32>
    %76 = arith.subf %63, %75 : vector<16x64xf32>
    %cst_22 = arith.constant 9.99999974E-6 : f32
    %77 = vector.broadcast %cst_22 : f32 to vector<16x1xf32>
    %78 = arith.addf %74, %77 : vector<16x1xf32>
    %79 = math.rsqrt %78 : vector<16x1xf32>
    %80 = vector.broadcast %79 : vector<16x1xf32> to vector<16x64xf32>
    %81 = arith.mulf %76, %80 : vector<16x64xf32>
    %82 = vector.broadcast %6 : vector<1x64xf32> to vector<16x64xf32>
    %83 = arith.mulf %81, %82 : vector<16x64xf32>
    %84 = vector.broadcast %7 : vector<1x64xf32> to vector<16x64xf32>
    %85 = arith.addf %83, %84 : vector<16x64xf32>
    %c0_23 = arith.constant 0 : index
    %c0_24 = arith.constant 0 : index
    %86 = vector.load %arg6[%c0_23, %c0_24] : memref<64x256xf32, #tpu.memory_space<vmem>>, vector<64x256xf32>
    %cst_25 = arith.constant dense<0.000000e+00> : vector<16x256xf32>
    %87 = tpu.matmul %85, %86, %cst_25 {dimension_numbers = #tpu.dot_dimension_numbers<[1], [0], [0], [1], [0, 0, 1, 1], [], []>} : vector<16x64xf32>, vector<64x256xf32>, vector<16x256xf32> -> vector<16x256xf32>
    %c0_26 = arith.constant 0 : index
    %c0_27 = arith.constant 0 : index
    %88 = vector.load %arg7[%c0_26, %c0_27] : memref<1x256xf32, #tpu.memory_space<vmem>>, vector<1x256xf32>
    %89 = vector.broadcast %88 : vector<1x256xf32> to vector<16x256xf32>
    %90 = arith.addf %87, %89 : vector<16x256xf32>
    %cst_28 = arith.constant 0.000000e+00 : f32
    %91 = vector.broadcast %cst_28 : f32 to vector<16x256xf32>
    %92 = arith.maximumf %90, %91 : vector<16x256xf32>
    %c0_29 = arith.constant 0 : index
    %c0_30 = arith.constant 0 : index
    %93 = vector.load %arg8[%c0_29, %c0_30] : memref<256x64xf32, #tpu.memory_space<vmem>>, vector<256x64xf32>
    %cst_31 = arith.constant dense<0.000000e+00> : vector<16x64xf32>
    %94 = tpu.matmul %92, %93, %cst_31 {dimension_numbers = #tpu.dot_dimension_numbers<[1], [0], [0], [1], [0, 0, 1, 1], [], []>} : vector<16x256xf32>, vector<256x64xf32>, vector<16x64xf32> -> vector<16x64xf32>
    %95 = vector.broadcast %5 : vector<1x64xf32> to vector<16x64xf32>
    %96 = arith.addf %94, %95 : vector<16x64xf32>
    %97 = arith.addf %85, %96 : vector<16x64xf32>
    %cst_32 = arith.constant dense<0.000000e+00> : vector<16xf32>
    %98 = vector.multi_reduction <add>, %97, %cst_32 [1] : vector<16x64xf32> to vector<16xf32>
    %99 = vector.shape_cast %98 : vector<16xf32> to vector<16x1xf32>
    %cst_33 = arith.constant 6.400000e+01 : f32
    %100 = vector.broadcast %cst_33 : f32 to vector<16x1xf32>
    %101 = arith.divf %99, %100 : vector<16x1xf32>
    %102 = vector.broadcast %101 : vector<16x1xf32> to vector<16x64xf32>
    %103 = arith.subf %97, %102 : vector<16x64xf32>
    %104 = arith.mulf %103, %103 : vector<16x64xf32>
    %cst_34 = arith.constant dense<0.000000e+00> : vector<16xf32>
    %105 = vector.multi_reduction <add>, %104, %cst_34 [1] : vector<16x64xf32> to vector<16xf32>
    %106 = vector.shape_cast %105 : vector<16xf32> to vector<16x1xf32>
    %cst_35 = arith.constant 6.400000e+01 : f32
    %107 = vector.broadcast %cst_35 : f32 to vector<16x1xf32>
    %108 = arith.divf %106, %107 : vector<16x1xf32>
    %109 = vector.broadcast %101 : vector<16x1xf32> to vector<16x64xf32>
    %110 = arith.subf %97, %109 : vector<16x64xf32>
    %cst_36 = arith.constant 9.99999974E-6 : f32
    %111 = vector.broadcast %cst_36 : f32 to vector<16x1xf32>
    %112 = arith.addf %108, %111 : vector<16x1xf32>
    %113 = math.rsqrt %112 : vector<16x1xf32>
    %114 = vector.broadcast %113 : vector<16x1xf32> to vector<16x64xf32>
    %115 = arith.mulf %110, %114 : vector<16x64xf32>
    %116 = vector.broadcast %8 : vector<1x64xf32> to vector<16x64xf32>
    %117 = arith.mulf %115, %116 : vector<16x64xf32>
    %118 = vector.broadcast %9 : vector<1x64xf32> to vector<16x64xf32>
    %119 = arith.addf %117, %118 : vector<16x64xf32>
    %120 = vector.shape_cast %119 : vector<16x64xf32> to vector<2x8x64xf32>
    %c0_37 = arith.constant 0 : index
    %c0_38 = arith.constant 0 : index
    %c0_39 = arith.constant 0 : index
    %121 = vector.load %arg10[%c0_37, %c0_38, %c0_39] : memref<2x8x64xf32, #tpu.memory_space<vmem>>, vector<2x8x64xf32>
    tpu.vector_store %arg10[%c0_37, %c0_38, %c0_39], %120 {strides = array<i32>} : memref<2x8x64xf32, #tpu.memory_space<vmem>>, vector<2x8x64xf32>,
    return
  }
  func.func @transform_0(%arg0: i32) -> (i32, i32, i32) {
    %c0_i32 = arith.constant 0 : i32
    %c0_i32_0 = arith.constant 0 : i32
    %c0_i32_1 = arith.constant 0 : i32
    return %arg0, %c0_i32, %c0_i32_0 : i32, i32, i32
  }
  func.func @transform_1(%arg0: i32) -> (i32, i32) {
    %c0_i32 = arith.constant 0 : i32
    %c0_i32_0 = arith.constant 0 : i32
    %c0_i32_1 = arith.constant 0 : i32
    return %c0_i32, %c0_i32_0 : i32, i32
  }
  func.func @transform_2(%arg0: i32) -> (i32, i32) {
    %c0_i32 = arith.constant 0 : i32
    %c0_i32_0 = arith.constant 0 : i32
    %c0_i32_1 = arith.constant 0 : i32
    return %c0_i32, %c0_i32_0 : i32, i32
  }
  func.func @transform_3(%arg0: i32) -> (i32, i32) {
    %c0_i32 = arith.constant 0 : i32
    %c0_i32_0 = arith.constant 0 : i32
    %c0_i32_1 = arith.constant 0 : i32
    return %c0_i32, %c0_i32_0 : i32, i32
  }
  func.func @transform_4(%arg0: i32) -> (i32, i32) {
    %c0_i32 = arith.constant 0 : i32
    %c0_i32_0 = arith.constant 0 : i32
    %c0_i32_1 = arith.constant 0 : i32
    return %c0_i32, %c0_i32_0 : i32, i32
  }
  func.func @transform_5(%arg0: i32) -> (i32, i32) {
    %c0_i32 = arith.constant 0 : i32
    %c0_i32_0 = arith.constant 0 : i32
    %c0_i32_1 = arith.constant 0 : i32
    return %c0_i32, %c0_i32_0 : i32, i32
  }
  func.func @transform_6(%arg0: i32) -> (i32, i32) {
    %c0_i32 = arith.constant 0 : i32
    %c0_i32_0 = arith.constant 0 : i32
    %c0_i32_1 = arith.constant 0 : i32
    return %c0_i32, %c0_i32_0 : i32, i32
  }
  func.func @transform_7(%arg0: i32) -> (i32, i32) {
    %c0_i32 = arith.constant 0 : i32
    %c0_i32_0 = arith.constant 0 : i32
    %c0_i32_1 = arith.constant 0 : i32
    return %c0_i32, %c0_i32_0 : i32, i32
  }
  func.func @transform_8(%arg0: i32) -> (i32, i32) {
    %c0_i32 = arith.constant 0 : i32
    %c0_i32_0 = arith.constant 0 : i32
    %c0_i32_1 = arith.constant 0 : i32
    return %c0_i32, %c0_i32_0 : i32, i32
  }
  func.func @transform_9(%arg0: i32) -> (i32, i32, i32) {
    %c0_i32 = arith.constant 0 : i32
    %c0_i32_0 = arith.constant 0 : i32
    %c0_i32_1 = arith.constant 0 : i32
    return %arg0, %c0_i32, %c0_i32_0 : i32, i32, i32
  }
}

</mosaic_0001>

<llo_original>
// kernel: tpu_custom_call.1
$region0: #{tpu_custom_call.1}
  #allocation0 [shape = 'u32[]', space=smem, size = 0x4, offset = 0x4, fixed_abs, tag = 'smem constant byte address 0x4 - core index']
  #allocation1 [shape = 'u32[144,128]{1,0:T(1,128)}', space=vmem, size = 0x12000, scoped, tag = 'internal scratch']
  %s0 = inlined_call_operand.vmem [shape: f32[2,8,64], index: 0, kind: input, shape index: {}]
  %s1 = inlined_call_operand.vmem [shape: f32[8,8], index: 1, kind: input, shape index: {}]
  %s2 = inlined_call_operand.vmem [shape: f32[64,192], index: 2, kind: input, shape index: {}]
  %s3 = inlined_call_operand.vmem [shape: f32[1,192], index: 3, kind: input, shape index: {}]
  %s4 = inlined_call_operand.vmem [shape: f32[64,64], index: 4, kind: input, shape index: {}]
  %s5 = inlined_call_operand.vmem [shape: f32[64,256], index: 5, kind: input, shape index: {}]
  %s6 = inlined_call_operand.vmem [shape: f32[1,256], index: 6, kind: input, shape index: {}]
  %s7 = inlined_call_operand.vmem [shape: f32[256,64], index: 7, kind: input, shape index: {}]
  %s8 = inlined_call_operand.vmem [shape: f32[8,64], index: 8, kind: input, shape index: {}]
  %s9 = inlined_call_operand.hbm [shape: f32[2,8,64], index: 9, kind: output, shape index: {}]
  %s10 = sld [smem:[#allocation0]]
  $region46: #{tpu_custom_call.1} parent=0
    _
  %s12 = ssub.s32 1, %s10
  %s13 = scalar_select 0, %s12, %s10
  $region1: #{tpu_custom_call.1} parent=0
    #allocation2 [shape = 'u8[8192]{0}', space=vmem, size = 0x2000, scoped, tag = 'output window, operand 0, single buffered']
    #allocation3 [shape = 's32[1]{0}', space=sflag, size = 0x4, scoped, tag = 'scoped memory for tpu_custom_call.1']
    %14 = vsyncpa [#allocation3], 0
    // Predicated region
    $region2: #{tpu_custom_call.1} parent=1 // pred_check
      _
    $region3: #{tpu_custom_call.1} parent=1 // pred_check_branch
      %16 = sbr.rel (0) target = $region5
    $region4: #{tpu_custom_call.1} parent=1 // pred_region
      _
    $region5: #{tpu_custom_call.1} parent=1 // pred_fallthru
      _
    // Predicated region
    $region6: #{tpu_custom_call.1} parent=1 // pred_check
      _
    $region7: #{tpu_custom_call.1} parent=1 // pred_check_branch
      %18 = sbr.rel (0) target = $region9
    $region8: #{tpu_custom_call.1} parent=1 // pred_region
      _
    $region9: #{tpu_custom_call.1} parent=1 // pred_fallthru
      _
    // Predicated region
    $region10: #{tpu_custom_call.1} parent=1 // pred_check
      _
    $region11: #{tpu_custom_call.1} parent=1 // pred_check_branch
      %20 = sbr.rel (0) target = $region13
    $region12: #{tpu_custom_call.1} parent=1 // pred_region
      _
    $region13: #{tpu_custom_call.1} parent=1 // pred_fallthru
      _
    // Predicated region
    $region14: #{tpu_custom_call.1} parent=1 // pred_check
      _
    $region15: #{tpu_custom_call.1} parent=1 // pred_check_branch
      %22 = sbr.rel (0) target = $region17
    $region16: #{tpu_custom_call.1} parent=1 // pred_region
      _
    $region17: #{tpu_custom_call.1} parent=1 // pred_fallthru
      _
    // Predicated region
    $region18: #{tpu_custom_call.1} parent=1 // pred_check
      _
    $region19: #{tpu_custom_call.1} parent=1 // pred_check_branch
      %24 = sbr.rel (0) target = $region21
    $region20: #{tpu_custom_call.1} parent=1 // pred_region
      _
    $region21: #{tpu_custom_call.1} parent=1 // pred_fallthru
      _
    // Predicated region
    $region22: #{tpu_custom_call.1} parent=1 // pred_check
      _
    $region23: #{tpu_custom_call.1} parent=1 // pred_check_branch
      %26 = sbr.rel (0) target = $region25
    $region24: #{tpu_custom_call.1} parent=1 // pred_region
      _
    $region25: #{tpu_custom_call.1} parent=1 // pred_fallthru
      _
    // Predicated region
    $region26: #{tpu_custom_call.1} parent=1 // pred_check
      _
    $region27: #{tpu_custom_call.1} parent=1 // pred_check_branch
      %28 = sbr.rel (0) target = $region29
    $region28: #{tpu_custom_call.1} parent=1 // pred_region
      _
    $region29: #{tpu_custom_call.1} parent=1 // pred_fallthru
      _
    // Predicated region
    $region30: #{tpu_custom_call.1} parent=1 // pred_check
      _
    $region31: #{tpu_custom_call.1} parent=1 // pred_check_branch
      %30 = sbr.rel (0) target = $region33
    $region32: #{tpu_custom_call.1} parent=1 // pred_region
      _
    $region33: #{tpu_custom_call.1} parent=1 // pred_fallthru
      _
    // Predicated region
    $region34: #{tpu_custom_call.1} parent=1 // pred_check
      _
    $region35: #{tpu_custom_call.1} parent=1 // pred_check_branch
      %32 = sbr.rel (0) target = $region37
    $region36: #{tpu_custom_call.1} parent=1 // pred_region
      _
    $region37: #{tpu_custom_call.1} parent=1 // pred_fallthru
      _
    %v33 = vld [vmem:[%s0] sm:$0xff]
    %v34 = vld [vmem:[%s0 + $0x8] sm:$0xff]
    %v35 = vld [vmem:[%s1] sm:$0xff]
    %v36 = vld [vmem:[%s8] sm:$0xff]
    %v37 = vld [vmem:[%s2] sm:$0xff]
    %v38 = vld [vmem:[%s2 + $0x8] sm:$0xff]
    %v39 = vld [vmem:[%s2 + $0x10] sm:$0xff]
    %v40 = vld [vmem:[%s2 + $0x18] sm:$0xff]
    %v41 = vld [vmem:[%s2 + $0x20] sm:$0xff]
    %v42 = vld [vmem:[%s2 + $0x28] sm:$0xff]
    %v43 = vld [vmem:[%s2 + $0x30] sm:$0xff]
    %v44 = vld [vmem:[%s2 + $0x38] sm:$0xff]
    %v45 = vld [vmem:[%s2 + $0x40] sm:$0xff]
    %v46 = vld [vmem:[%s2 + $0x48] sm:$0xff]
    %v47 = vld [vmem:[%s2 + $0x50] sm:$0xff]
    %v48 = vld [vmem:[%s2 + $0x58] sm:$0xff]
    %v49 = vld [vmem:[%s2 + $0x60] sm:$0xff]
    %v50 = vld [vmem:[%s2 + $0x68] sm:$0xff]
    %v51 = vld [vmem:[%s2 + $0x70] sm:$0xff]
    %v52 = vld [vmem:[%s2 + $0x78] sm:$0xff]
    %v53 = vld [vmem:[%s3] sm:$0x3]
    %v55 = vlaneseq
    %v56 = vshrl.u32 %v55, 7
    %v57 = vsub.s32 0, %v56
    %v58 = vrot.slane %v53, %v57
    %v59 = vlaneseq
    %v60 = vshrl.u32 %v59, 7
    %v61 = vsub.s32 1, %v60
    %v62 = vrot.slane %v53, %v61
    %vm65 = vcmask 523264
    %v67 = vsel %vm65, %v33, 0
    %v70 = vsel %vm65, %v34, 0
    %72 = vmatprep.subr.mxu0 %v38
    %73 = vmatpush1.msra.mxu0 %v37
    %74 = vmatprep.subr.mxu0 %v40
    %75 = vmatpush1.msra.mxu0 %v39
    %76 = vmatprep.subr.mxu0 %v42
    %77 = vmatpush1.msra.mxu0 %v41
    %78 = vmatprep.subr.mxu0 %v44
    %79 = vmatpush1.msra.mxu0 %v43
    %80 = vmatprep.subr.mxu0 %v46
    %81 = vmatpush1.msra.mxu0 %v45
    %82 = vmatprep.subr.mxu0 %v48
    %83 = vmatpush1.msra.mxu0 %v47
    %84 = vmatprep.subr.mxu0 %v50
    %85 = vmatpush1.msra.mxu0 %v49
    %86 = vmatprep.subr.mxu0 %v52
    %87 = vmatpush1.msra.mxu0 %v51
    %88 = vmatprep.subr.mxu0 0.0
    %89 = vmatpush1.msra.mxu0 0.0
    %90 = vmatprep.subr.mxu0 0.0
    %91 = vmatpush1.msra.mxu0 0.0
    %92 = vmatprep.subr.mxu0 0.0
    %93 = vmatpush1.msra.mxu0 0.0
    %94 = vmatprep.subr.mxu0 0.0
    %95 = vmatpush1.msra.mxu0 0.0
    %96 = vmatprep.subr.mxu0 0.0
    %97 = vmatpush1.msra.mxu0 0.0
    %98 = vmatprep.subr.mxu0 0.0
    %99 = vmatpush1.msra.mxu0 0.0
    %100 = vmatprep.subr.mxu0 0.0
    %101 = vmatpush1.msra.mxu0 0.0
    %102 = vmatprep.subr.mxu0 0.0
    %103 = vmatpush1.msra.mxu0 0.0
    %104 = vmatprep.subr.mxu0 0.0
    %105 = vmatpush1.msra.mxu0 0.0
    %106 = vmatprep.subr.mxu0 0.0
    %107 = vmatpush1.msra.mxu0 0.0
    %108 = vmatprep.subr.mxu0 0.0
    %109 = vmatpush1.msra.mxu0 0.0
    %110 = vmatprep.subr.mxu0 0.0
    %111 = vmatpush1.msra.mxu0 0.0
    %112 = vmatprep.subr.mxu0 0.0
    %113 = vmatpush1.msra.mxu0 0.0
    %114 = vmatprep.subr.mxu0 0.0
    %115 = vmatpush1.msra.mxu0 0.0
    %116 = vmatprep.subr.mxu0 0.0
    %117 = vmatpush1.msra.mxu0 0.0
    %118 = vmatprep.subr.mxu0 0.0
    %119 = vmatpush1.msra.mxu0 0.0
    %120 = vmatprep.subr.mxu0 0.0
    %121 = vmatpush1.msra.mxu0 0.0
    %122 = vmatprep.subr.mxu0 0.0
    %123 = vmatpush1.msra.mxu0 0.0
    %124 = vmatprep.subr.mxu0 0.0
    %125 = vmatpush1.msra.mxu0 0.0
    %126 = vmatprep.subr.mxu0 0.0
    %127 = vmatpush1.msra.mxu0 0.0
    %128 = vmatprep.subr.mxu0 0.0
    %129 = vmatpush1.msra.mxu0 0.0
    %130 = vmatprep.subr.mxu0 0.0
    %131 = vmatpush1.msra.mxu0 0.0
    %132 = vmatprep.subr.mxu0 0.0
    %133 = vmatpush1.msra.mxu0 0.0
    %134 = vmatprep.subr.mxu0 0.0
    %135 = vmatpush1.msra.mxu0 0.0
    %136 = vmatprep.mubr.f32.mxu0 0.0
    %137 = vmatmul.mubr.f32.gmra.mrb[0].mxu0 %v67
    %v138 = vpop.f32.mrb[0].mxu0
    %v139 = vadd.f32 %v58, %v138
    %v140 = vpop.f32.mrb[0].mxu0
    %v141 = vadd.f32 %v62, %v140
    %142 = vmatprep.mubr.f32.mxu0 0.0
    %143 = vmatmul.mubr.f32.gmra.mrb[0].mxu0 %v70
    %v144 = vpop.f32.mrb[0].mxu0
    %v145 = vadd.f32 %v58, %v144
    %v146 = vpop.f32.mrb[0].mxu0
    %v147 = vadd.f32 %v62, %v146
    %148 = vdwg.mxu0
    %v149 = vmul.f32 %v139, 0.25
    %v150 = vmul.f32 %v145, 0.25
    %153 = vrot.lane.b32.xlu0 %v149, 112
    %v154 = vpop.permute.xlu0 %153
    %155 = vrot.lane.b32.xlu0 %v150, 112
    %v156 = vpop.permute.xlu0 %155
    %157 = vrot.lane.b32.xlu0 %v149, 96
    %v158 = vpop.permute.xlu0 %157
    %159 = vrot.lane.b32.xlu0 %v150, 96
    %v160 = vpop.permute.xlu0 %159
    %161 = vrot.lane.b32.xlu0 %v149, 80
    %v162 = vpop.permute.xlu0 %161
    %163 = vrot.lane.b32.xlu0 %v150, 80
    %v164 = vpop.permute.xlu0 %163
    %167 = vrot.lane.b32.xlu0 %v139, 112
    %v168 = vpop.permute.xlu0 %167
    %169 = vrot.lane.b32.xlu0 %v145, 112
    %v170 = vpop.permute.xlu0 %169
    %171 = vrot.lane.b32.xlu0 %v139, 96
    %v172 = vpop.permute.xlu0 %171
    %173 = vrot.lane.b32.xlu0 %v145, 96
    %v174 = vpop.permute.xlu0 %173
    %175 = vrot.lane.b32.xlu0 %v139, 80
    %v176 = vpop.permute.xlu0 %175
    %177 = vrot.lane.b32.xlu0 %v145, 80
    %v178 = vpop.permute.xlu0 %177
    %181 = vrot.lane.b32.xlu0 %v141, 112
    %v182 = vpop.permute.xlu0 %181
    %183 = vrot.lane.b32.xlu0 %v147, 112
    %v184 = vpop.permute.xlu0 %183
    %187 = vrot.lane.b32.xlu0 %v141, 96
    %v188 = vpop.permute.xlu0 %187
    %189 = vrot.lane.b32.xlu0 %v147, 96
    %v190 = vpop.permute.xlu0 %189
    %193 = vrot.lane.b32.xlu0 %v141, 80
    %v194 = vpop.permute.xlu0 %193
    %195 = vrot.lane.b32.xlu0 %v147, 80
    %v196 = vpop.permute.xlu0 %195
    %199 = vrot.lane.b32.xlu0 %v139, 64
    %v200 = vpop.permute.xlu0 %199
    %vm201 = vcmask 130048
    %v202 = vsel %vm201, %v149, 0
    %v204 = vsel %vm201, %v200, 0
    %206 = vmatprep.subr.mxu0 0.0
    %207 = vmatpush1.xpose.msra.mxu0 %v204
    %208 = vmatprep.subr.mxu0 0.0
    %209 = vmatpush1.xpose.msra.mxu0 0.0
    %210 = vmatprep.subr.mxu0 0.0
    %211 = vmatpush1.xpose.msra.mxu0 0.0
    %212 = vmatprep.subr.mxu0 0.0
    %213 = vmatpush1.xpose.msra.mxu0 0.0
    %214 = vmatprep.subr.mxu0 0.0
    %215 = vmatpush1.xpose.msra.mxu0 0.0
    %216 = vmatprep.subr.mxu0 0.0
    %217 = vmatpush1.xpose.msra.mxu0 0.0
    %218 = vmatprep.subr.mxu0 0.0
    %219 = vmatpush1.xpose.msra.mxu0 0.0
    %220 = vmatprep.subr.mxu0 0.0
    %221 = vmatpush1.xpose.msra.mxu0 0.0
    %222 = vmatprep.subr.mxu0 0.0
    %223 = vmatpush1.xpose.msra.mxu0 0.0
    %224 = vmatprep.subr.mxu0 0.0
    %225 = vmatpush1.xpose.msra.mxu0 0.0
    %226 = vmatprep.subr.mxu0 0.0
    %227 = vmatpush1.xpose.msra.mxu0 0.0
    %228 = vmatprep.subr.mxu0 0.0
    %229 = vmatpush1.xpose.msra.mxu0 0.0
    %230 = vmatprep.subr.mxu0 0.0
    %231 = vmatpush1.xpose.msra.mxu0 0.0
    %232 = vmatprep.subr.mxu0 0.0
    %233 = vmatpush1.xpose.msra.mxu0 0.0
    %234 = vmatprep.subr.mxu0 0.0
    %235 = vmatpush1.xpose.msra.mxu0 0.0
    %236 = vmatprep.subr.mxu0 0.0
    %237 = vmatpush1.xpose.msra.mxu0 0.0
    %238 = vmatprep.subr.mxu0 0.0
    %239 = vmatpush1.xpose.msra.mxu0 0.0
    %240 = vmatprep.subr.mxu0 0.0
    %241 = vmatpush1.xpose.msra.mxu0 0.0
    %242 = vmatprep.subr.mxu0 0.0
    %243 = vmatpush1.xpose.msra.mxu0 0.0
    %244 = vmatprep.subr.mxu0 0.0
    %245 = vmatpush1.xpose.msra.mxu0 0.0
    %246 = vmatprep.subr.mxu0 0.0
    %247 = vmatpush1.xpose.msra.mxu0 0.0
    %248 = vmatprep.subr.mxu0 0.0
    %249 = vmatpush1.xpose.msra.mxu0 0.0
    %250 = vmatprep.subr.mxu0 0.0
    %251 = vmatpush1.xpose.msra.mxu0 0.0
    %252 = vmatprep.subr.mxu0 0.0
    %253 = vmatpush1.xpose.msra.mxu0 0.0
    %254 = vmatprep.subr.mxu0 0.0
    %255 = vmatpush1.xpose.msra.mxu0 0.0
    %256 = vmatprep.subr.mxu0 0.0
    %257 = vmatpush1.xpose.msra.mxu0 0.0
    %258 = vmatprep.subr.mxu0 0.0
    %259 = vmatpush1.xpose.msra.mxu0 0.0
    %260 = vmatprep.subr.mxu0 0.0
    %261 = vmatpush1.xpose.msra.mxu0 0.0
    %262 = vmatprep.subr.mxu0 0.0
    %263 = vmatpush1.xpose.msra.mxu0 0.0
    %264 = vmatprep.subr.mxu0 0.0
    %265 = vmatpush1.xpose.msra.mxu0 0.0
    %266 = vmatprep.subr.mxu0 0.0
    %267 = vmatpush1.xpose.msra.mxu0 0.0
    %268 = vmatprep.subr.mxu0 0.0
    %269 = vmatpush1.xpose.msra.mxu0 0.0
    %270 = vmatprep.mubr.f32.mxu0 0.0
    %271 = vmatmul.mubr.f32.gmra.mrb[0].mxu0 %v202
    %v272 = vpop.f32.mrb[0].mxu0
    %v273 = vadd.f32 %v35, %v272
    %v274 = vpop.f32.mrb[0].mxu0
    %275 = vdwg.mxu0
    %276 = vrot.lane.b32.xlu0 %v145, 64
    %v277 = vpop.permute.xlu0 %276
    %v278 = vsel %vm201, %v150, 0
    %v280 = vsel %vm201, %v277, 0
    %282 = vmatprep.subr.mxu0 0.0
    %283 = vmatpush1.xpose.msra.mxu0 %v280
    %284 = vmatprep.subr.mxu0 0.0
    %285 = vmatpush1.xpose.msra.mxu0 0.0
    %286 = vmatprep.subr.mxu0 0.0
    %287 = vmatpush1.xpose.msra.mxu0 0.0
    %288 = vmatprep.subr.mxu0 0.0
    %289 = vmatpush1.xpose.msra.mxu0 0.0
    %290 = vmatprep.subr.mxu0 0.0
    %291 = vmatpush1.xpose.msra.mxu0 0.0
    %292 = vmatprep.subr.mxu0 0.0
    %293 = vmatpush1.xpose.msra.mxu0 0.0
    %294 = vmatprep.subr.mxu0 0.0
    %295 = vmatpush1.xpose.msra.mxu0 0.0
    %296 = vmatprep.subr.mxu0 0.0
    %297 = vmatpush1.xpose.msra.mxu0 0.0
    %298 = vmatprep.subr.mxu0 0.0
    %299 = vmatpush1.xpose.msra.mxu0 0.0
    %300 = vmatprep.subr.mxu0 0.0
    %301 = vmatpush1.xpose.msra.mxu0 0.0
    %302 = vmatprep.subr.mxu0 0.0
    %303 = vmatpush1.xpose.msra.mxu0 0.0
    %304 = vmatprep.subr.mxu0 0.0
    %305 = vmatpush1.xpose.msra.mxu0 0.0
    %306 = vmatprep.subr.mxu0 0.0
    %307 = vmatpush1.xpose.msra.mxu0 0.0
    %308 = vmatprep.subr.mxu0 0.0
    %309 = vmatpush1.xpose.msra.mxu0 0.0
    %310 = vmatprep.subr.mxu0 0.0
    %311 = vmatpush1.xpose.msra.mxu0 0.0
    %312 = vmatprep.subr.mxu0 0.0
    %313 = vmatpush1.xpose.msra.mxu0 0.0
    %314 = vmatprep.subr.mxu0 0.0
    %315 = vmatpush1.xpose.msra.mxu0 0.0
    %316 = vmatprep.subr.mxu0 0.0
    %317 = vmatpush1.xpose.msra.mxu0 0.0
    %318 = vmatprep.subr.mxu0 0.0
    %319 = vmatpush1.xpose.msra.mxu0 0.0
    %320 = vmatprep.subr.mxu0 0.0
    %321 = vmatpush1.xpose.msra.mxu0 0.0
    %322 = vmatprep.subr.mxu0 0.0
    %323 = vmatpush1.xpose.msra.mxu0 0.0
    %324 = vmatprep.subr.mxu0 0.0
    %325 = vmatpush1.xpose.msra.mxu0 0.0
    %326 = vmatprep.subr.mxu0 0.0
    %327 = vmatpush1.xpose.msra.mxu0 0.0
    %328 = vmatprep.subr.mxu0 0.0
    %329 = vmatpush1.xpose.msra.mxu0 0.0
    %330 = vmatprep.subr.mxu0 0.0
    %331 = vmatpush1.xpose.msra.mxu0 0.0
    %332 = vmatprep.subr.mxu0 0.0
    %333 = vmatpush1.xpose.msra.mxu0 0.0
    %334 = vmatprep.subr.mxu0 0.0
    %335 = vmatpush1.xpose.msra.mxu0 0.0
    %336 = vmatprep.subr.mxu0 0.0
    %337 = vmatpush1.xpose.msra.mxu0 0.0
    %338 = vmatprep.subr.mxu0 0.0
    %339 = vmatpush1.xpose.msra.mxu0 0.0
    %340 = vmatprep.subr.mxu0 0.0
    %341 = vmatpush1.xpose.msra.mxu0 0.0
    %342 = vmatprep.subr.mxu0 0.0
    %343 = vmatpush1.xpose.msra.mxu0 0.0
    %344 = vmatprep.subr.mxu0 0.0
    %345 = vmatpush1.xpose.msra.mxu0 0.0
    %346 = vmatprep.mubr.f32.mxu0 0.0
    %347 = vmatmul.mubr.f32.gmra.mrb[0].mxu0 %v278
    %v348 = vpop.f32.mrb[0].mxu0
    %v349 = vadd.f32 %v35, %v348
    %v350 = vpop.f32.mrb[0].mxu0
    %351 = vdwg.mxu0
    %352 = vrot.lane.b32.xlu0 %v168, 64
    %v353 = vpop.permute.xlu0 %352
    %v354 = vsel %vm201, %v154, 0
    %v356 = vsel %vm201, %v353, 0
    %358 = vmatprep.subr.mxu0 0.0
    %359 = vmatpush1.xpose.msra.mxu0 %v356
    %360 = vmatprep.subr.mxu0 0.0
    %361 = vmatpush1.xpose.msra.mxu0 0.0
    %362 = vmatprep.subr.mxu0 0.0
    %363 = vmatpush1.xpose.msra.mxu0 0.0
    %364 = vmatprep.subr.mxu0 0.0
    %365 = vmatpush1.xpose.msra.mxu0 0.0
    %366 = vmatprep.subr.mxu0 0.0
    %367 = vmatpush1.xpose.msra.mxu0 0.0
    %368 = vmatprep.subr.mxu0 0.0
    %369 = vmatpush1.xpose.msra.mxu0 0.0
    %370 = vmatprep.subr.mxu0 0.0
    %371 = vmatpush1.xpose.msra.mxu0 0.0
    %372 = vmatprep.subr.mxu0 0.0
    %373 = vmatpush1.xpose.msra.mxu0 0.0
    %374 = vmatprep.subr.mxu0 0.0
    %375 = vmatpush1.xpose.msra.mxu0 0.0
    %376 = vmatprep.subr.mxu0 0.0
    %377 = vmatpush1.xpose.msra.mxu0 0.0
    %378 = vmatprep.subr.mxu0 0.0
    %379 = vmatpush1.xpose.msra.mxu0 0.0
    %380 = vmatprep.subr.mxu0 0.0
    %381 = vmatpush1.xpose.msra.mxu0 0.0
    %382 = vmatprep.subr.mxu0 0.0
    %383 = vmatpush1.xpose.msra.mxu0 0.0
    %384 = vmatprep.subr.mxu0 0.0
    %385 = vmatpush1.xpose.msra.mxu0 0.0
    %386 = vmatprep.subr.mxu0 0.0
    %387 = vmatpush1.xpose.msra.mxu0 0.0
    %388 = vmatprep.subr.mxu0 0.0
    %389 = vmatpush1.xpose.msra.mxu0 0.0
    %390 = vmatprep.subr.mxu0 0.0
    %391 = vmatpush1.xpose.msra.mxu0 0.0
    %392 = vmatprep.subr.mxu0 0.0
    %393 = vmatpush1.xpose.msra.mxu0 0.0
    %394 = vmatprep.subr.mxu0 0.0
    %395 = vmatpush1.xpose.msra.mxu0 0.0
    %396 = vmatprep.subr.mxu0 0.0
    %397 = vmatpush1.xpose.msra.mxu0 0.0
    %398 = vmatprep.subr.mxu0 0.0
    %399 = vmatpush1.xpose.msra.mxu0 0.0
    %400 = vmatprep.subr.mxu0 0.0
    %401 = vmatpush1.xpose.msra.mxu0 0.0
    %402 = vmatprep.subr.mxu0 0.0
    %403 = vmatpush1.xpose.msra.mxu0 0.0
    %404 = vmatprep.subr.mxu0 0.0
    %405 = vmatpush1.xpose.msra.mxu0 0.0
    %406 = vmatprep.subr.mxu0 0.0
    %407 = vmatpush1.xpose.msra.mxu0 0.0
    %408 = vmatprep.subr.mxu0 0.0
    %409 = vmatpush1.xpose.msra.mxu0 0.0
    %410 = vmatprep.subr.mxu0 0.0
    %411 = vmatpush1.xpose.msra.mxu0 0.0
    %412 = vmatprep.subr.mxu0 0.0
    %413 = vmatpush1.xpose.msra.mxu0 0.0
    %414 = vmatprep.subr.mxu0 0.0
    %415 = vmatpush1.xpose.msra.mxu0 0.0
    %416 = vmatprep.subr.mxu0 0.0
    %417 = vmatpush1.xpose.msra.mxu0 0.0
    %418 = vmatprep.subr.mxu0 0.0
    %419 = vmatpush1.xpose.msra.mxu0 0.0
    %420 = vmatprep.subr.mxu0 0.0
    %421 = vmatpush1.xpose.msra.mxu0 0.0
    %422 = vmatprep.mubr.f32.mxu0 0.0
    %423 = vmatmul.mubr.f32.gmra.mrb[0].mxu0 %v354
    %v424 = vpop.f32.mrb[0].mxu0
    %v425 = vadd.f32 %v35, %v424
    %v426 = vpop.f32.mrb[0].mxu0
    %427 = vdwg.mxu0
    %428 = vrot.lane.b32.xlu0 %v170, 64
    %v429 = vpop.permute.xlu0 %428
    %v430 = vsel %vm201, %v156, 0
    %v432 = vsel %vm201, %v429, 0
    %434 = vmatprep.subr.mxu0 0.0
    %435 = vmatpush1.xpose.msra.mxu0 %v432
    %436 = vmatprep.subr.mxu0 0.0
    %437 = vmatpush1.xpose.msra.mxu0 0.0
    %438 = vmatprep.subr.mxu0 0.0
    %439 = vmatpush1.xpose.msra.mxu0 0.0
    %440 = vmatprep.subr.mxu0 0.0
    %441 = vmatpush1.xpose.msra.mxu0 0.0
    %442 = vmatprep.subr.mxu0 0.0
    %443 = vmatpush1.xpose.msra.mxu0 0.0
    %444 = vmatprep.subr.mxu0 0.0
    %445 = vmatpush1.xpose.msra.mxu0 0.0
    %446 = vmatprep.subr.mxu0 0.0
    %447 = vmatpush1.xpose.msra.mxu0 0.0
    %448 = vmatprep.subr.mxu0 0.0
    %449 = vmatpush1.xpose.msra.mxu0 0.0
    %450 = vmatprep.subr.mxu0 0.0
    %451 = vmatpush1.xpose.msra.mxu0 0.0
    %452 = vmatprep.subr.mxu0 0.0
    %453 = vmatpush1.xpose.msra.mxu0 0.0
    %454 = vmatprep.subr.mxu0 0.0
    %455 = vmatpush1.xpose.msra.mxu0 0.0
    %456 = vmatprep.subr.mxu0 0.0
    %457 = vmatpush1.xpose.msra.mxu0 0.0
    %458 = vmatprep.subr.mxu0 0.0
    %459 = vmatpush1.xpose.msra.mxu0 0.0
    %460 = vmatprep.subr.mxu0 0.0
    %461 = vmatpush1.xpose.msra.mxu0 0.0
    %462 = vmatprep.subr.mxu0 0.0
    %463 = vmatpush1.xpose.msra.mxu0 0.0
    %464 = vmatprep.subr.mxu0 0.0
    %465 = vmatpush1.xpose.msra.mxu0 0.0
    %466 = vmatprep.subr.mxu0 0.0
    %467 = vmatpush1.xpose.msra.mxu0 0.0
    %468 = vmatprep.subr.mxu0 0.0
    %469 = vmatpush1.xpose.msra.mxu0 0.0
    %470 = vmatprep.subr.mxu0 0.0
    %471 = vmatpush1.xpose.msra.mxu0 0.0
    %472 = vmatprep.subr.mxu0 0.0
    %473 = vmatpush1.xpose.msra.mxu0 0.0
    %474 = vmatprep.subr.mxu0 0.0
    %475 = vmatpush1.xpose.msra.mxu0 0.0
    %476 = vmatprep.subr.mxu0 0.0
    %477 = vmatpush1.xpose.msra.mxu0 0.0
    %478 = vmatprep.subr.mxu0 0.0
    %479 = vmatpush1.xpose.msra.mxu0 0.0
    %480 = vmatprep.subr.mxu0 0.0
    %481 = vmatpush1.xpose.msra.mxu0 0.0
    %482 = vmatprep.subr.mxu0 0.0
    %483 = vmatpush1.xpose.msra.mxu0 0.0
    %484 = vmatprep.subr.mxu0 0.0
    %485 = vmatpush1.xpose.msra.mxu0 0.0
    %486 = vmatprep.subr.mxu0 0.0
    %487 = vmatpush1.xpose.msra.mxu0 0.0
    %488 = vmatprep.subr.mxu0 0.0
    %489 = vmatpush1.xpose.msra.mxu0 0.0
    %490 = vmatprep.subr.mxu0 0.0
    %491 = vmatpush1.xpose.msra.mxu0 0.0
    %492 = vmatprep.subr.mxu0 0.0
    %493 = vmatpush1.xpose.msra.mxu0 0.0
    %494 = vmatprep.subr.mxu0 0.0
    %495 = vmatpush1.xpose.msra.mxu0 0.0
    %496 = vmatprep.subr.mxu0 0.0
    %497 = vmatpush1.xpose.msra.mxu0 0.0
    %498 = vmatprep.mubr.f32.mxu0 0.0
    %499 = vmatmul.mubr.f32.gmra.mrb[0].mxu0 %v430
    %v500 = vpop.f32.mrb[0].mxu0
    %v501 = vadd.f32 %v35, %v500
    %v502 = vpop.f32.mrb[0].mxu0
    %503 = vdwg.mxu0
    %504 = vrot.lane.b32.xlu0 %v172, 64
    %v505 = vpop.permute.xlu0 %504
    %v506 = vsel %vm201, %v158, 0
    %v508 = vsel %vm201, %v505, 0
    %510 = vmatprep.subr.mxu0 0.0
    %511 = vmatpush1.xpose.msra.mxu0 %v508
    %512 = vmatprep.subr.mxu0 0.0
    %513 = vmatpush1.xpose.msra.mxu0 0.0
    %514 = vmatprep.subr.mxu0 0.0
    %515 = vmatpush1.xpose.msra.mxu0 0.0
    %516 = vmatprep.subr.mxu0 0.0
    %517 = vmatpush1.xpose.msra.mxu0 0.0
    %518 = vmatprep.subr.mxu0 0.0
    %519 = vmatpush1.xpose.msra.mxu0 0.0
    %520 = vmatprep.subr.mxu0 0.0
    %521 = vmatpush1.xpose.msra.mxu0 0.0
    %522 = vmatprep.subr.mxu0 0.0
    %523 = vmatpush1.xpose.msra.mxu0 0.0
    %524 = vmatprep.subr.mxu0 0.0
    %525 = vmatpush1.xpose.msra.mxu0 0.0
    %526 = vmatprep.subr.mxu0 0.0
    %527 = vmatpush1.xpose.msra.mxu0 0.0
    %528 = vmatprep.subr.mxu0 0.0
    %529 = vmatpush1.xpose.msra.mxu0 0.0
    %530 = vmatprep.subr.mxu0 0.0
    %531 = vmatpush1.xpose.msra.mxu0 0.0
    %532 = vmatprep.subr.mxu0 0.0
    %533 = vmatpush1.xpose.msra.mxu0 0.0
    %534 = vmatprep.subr.mxu0 0.0
    %535 = vmatpush1.xpose.msra.mxu0 0.0
    %536 = vmatprep.subr.mxu0 0.0
    %537 = vmatpush1.xpose.msra.mxu0 0.0
    %538 = vmatprep.subr.mxu0 0.0
    %539 = vmatpush1.xpose.msra.mxu0 0.0
    %540 = vmatprep.subr.mxu0 0.0
    %541 = vmatpush1.xpose.msra.mxu0 0.0
    %542 = vmatprep.subr.mxu0 0.0
    %543 = vmatpush1.xpose.msra.mxu0 0.0
    %544 = vmatprep.subr.mxu0 0.0
    %545 = vmatpush1.xpose.msra.mxu0 0.0
    %546 = vmatprep.subr.mxu0 0.0
    %547 = vmatpush1.xpose.msra.mxu0 0.0
    %548 = vmatprep.subr.mxu0 0.0
    %549 = vmatpush1.xpose.msra.mxu0 0.0
    %550 = vmatprep.subr.mxu0 0.0
    %551 = vmatpush1.xpose.msra.mxu0 0.0
    %552 = vmatprep.subr.mxu0 0.0
    %553 = vmatpush1.xpose.msra.mxu0 0.0
    %554 = vmatprep.subr.mxu0 0.0
    %555 = vmatpush1.xpose.msra.mxu0 0.0
    %556 = vmatprep.subr.mxu0 0.0
    %557 = vmatpush1.xpose.msra.mxu0 0.0
    %558 = vmatprep.subr.mxu0 0.0
    %559 = vmatpush1.xpose.msra.mxu0 0.0
    %560 = vmatprep.subr.mxu0 0.0
    %561 = vmatpush1.xpose.msra.mxu0 0.0
    %562 = vmatprep.subr.mxu0 0.0
    %563 = vmatpush1.xpose.msra.mxu0 0.0
    %564 = vmatprep.subr.mxu0 0.0
    %565 = vmatpush1.xpose.msra.mxu0 0.0
    %566 = vmatprep.subr.mxu0 0.0
    %567 = vmatpush1.xpose.msra.mxu0 0.0
    %568 = vmatprep.subr.mxu0 0.0
    %569 = vmatpush1.xpose.msra.mxu0 0.0
    %570 = vmatprep.subr.mxu0 0.0
    %571 = vmatpush1.xpose.msra.mxu0 0.0
    %572 = vmatprep.subr.mxu0 0.0
    %573 = vmatpush1.xpose.msra.mxu0 0.0
    %574 = vmatprep.mubr.f32.mxu0 0.0
    %575 = vmatmul.mubr.f32.gmra.mrb[0].mxu0 %v506
    %v576 = vpop.f32.mrb[0].mxu0
    %v577 = vadd.f32 %v35, %v576
    %v578 = vpop.f32.mrb[0].mxu0
    %579 = vdwg.mxu0
    %580 = vrot.lane.b32.xlu0 %v174, 64
    %v581 = vpop.permute.xlu0 %580
    %v582 = vsel %vm201, %v160, 0
    %v584 = vsel %vm201, %v581, 0
    %586 = vmatprep.subr.mxu0 0.0
    %587 = vmatpush1.xpose.msra.mxu0 %v584
    %588 = vmatprep.subr.mxu0 0.0
    %589 = vmatpush1.xpose.msra.mxu0 0.0
    %590 = vmatprep.subr.mxu0 0.0
    %591 = vmatpush1.xpose.msra.mxu0 0.0
    %592 = vmatprep.subr.mxu0 0.0
    %593 = vmatpush1.xpose.msra.mxu0 0.0
    %594 = vmatprep.subr.mxu0 0.0
    %595 = vmatpush1.xpose.msra.mxu0 0.0
    %596 = vmatprep.subr.mxu0 0.0
    %597 = vmatpush1.xpose.msra.mxu0 0.0
    %598 = vmatprep.subr.mxu0 0.0
    %599 = vmatpush1.xpose.msra.mxu0 0.0
    %600 = vmatprep.subr.mxu0 0.0
    %601 = vmatpush1.xpose.msra.mxu0 0.0
    %602 = vmatprep.subr.mxu0 0.0
    %603 = vmatpush1.xpose.msra.mxu0 0.0
    %604 = vmatprep.subr.mxu0 0.0
    %605 = vmatpush1.xpose.msra.mxu0 0.0
    %606 = vmatprep.subr.mxu0 0.0
    %607 = vmatpush1.xpose.msra.mxu0 0.0
    %608 = vmatprep.subr.mxu0 0.0
    %609 = vmatpush1.xpose.msra.mxu0 0.0
    %610 = vmatprep.subr.mxu0 0.0
    %611 = vmatpush1.xpose.msra.mxu0 0.0
    %612 = vmatprep.subr.mxu0 0.0
    %613 = vmatpush1.xpose.msra.mxu0 0.0
    %614 = vmatprep.subr.mxu0 0.0
    %615 = vmatpush1.xpose.msra.mxu0 0.0
    %616 = vmatprep.subr.mxu0 0.0
    %617 = vmatpush1.xpose.msra.mxu0 0.0
    %618 = vmatprep.subr.mxu0 0.0
    %619 = vmatpush1.xpose.msra.mxu0 0.0
    %620 = vmatprep.subr.mxu0 0.0
    %621 = vmatpush1.xpose.msra.mxu0 0.0
    %622 = vmatprep.subr.mxu0 0.0
    %623 = vmatpush1.xpose.msra.mxu0 0.0
    %624 = vmatprep.subr.mxu0 0.0
    %625 = vmatpush1.xpose.msra.mxu0 0.0
    %626 = vmatprep.subr.mxu0 0.0
    %627 = vmatpush1.xpose.msra.mxu0 0.0
    %628 = vmatprep.subr.mxu0 0.0
    %629 = vmatpush1.xpose.msra.mxu0 0.0
    %630 = vmatprep.subr.mxu0 0.0
    %631 = vmatpush1.xpose.msra.mxu0 0.0
    %632 = vmatprep.subr.mxu0 0.0
    %633 = vmatpush1.xpose.msra.mxu0 0.0
    %634 = vmatprep.subr.mxu0 0.0
    %635 = vmatpush1.xpose.msra.mxu0 0.0
    %636 = vmatprep.subr.mxu0 0.0
    %637 = vmatpush1.xpose.msra.mxu0 0.0
    %638 = vmatprep.subr.mxu0 0.0
    %639 = vmatpush1.xpose.msra.mxu0 0.0
    %640 = vmatprep.subr.mxu0 0.0
    %641 = vmatpush1.xpose.msra.mxu0 0.0
    %642 = vmatprep.subr.mxu0 0.0
    %643 = vmatpush1.xpose.msra.mxu0 0.0
    %644 = vmatprep.subr.mxu0 0.0
    %645 = vmatpush1.xpose.msra.mxu0 0.0
    %646 = vmatprep.subr.mxu0 0.0
    %647 = vmatpush1.xpose.msra.mxu0 0.0
    %648 = vmatprep.subr.mxu0 0.0
    %649 = vmatpush1.xpose.msra.mxu0 0.0
    %650 = vmatprep.mubr.f32.mxu0 0.0
    %651 = vmatmul.mubr.f32.gmra.mrb[0].mxu0 %v582
    %v652 = vpop.f32.mrb[0].mxu0
    %v653 = vadd.f32 %v35, %v652
    %v654 = vpop.f32.mrb[0].mxu0
    %655 = vdwg.mxu0
    %656 = vrot.lane.b32.xlu0 %v176, 64
    %v657 = vpop.permute.xlu0 %656
    %v658 = vsel %vm201, %v162, 0
    %v660 = vsel %vm201, %v657, 0
    %662 = vmatprep.subr.mxu0 0.0
    %663 = vmatpush1.xpose.msra.mxu0 %v660
    %664 = vmatprep.subr.mxu0 0.0
    %665 = vmatpush1.xpose.msra.mxu0 0.0
    %666 = vmatprep.subr.mxu0 0.0
    %667 = vmatpush1.xpose.msra.mxu0 0.0
    %668 = vmatprep.subr.mxu0 0.0
    %669 = vmatpush1.xpose.msra.mxu0 0.0
    %670 = vmatprep.subr.mxu0 0.0
    %671 = vmatpush1.xpose.msra.mxu0 0.0
    %672 = vmatprep.subr.mxu0 0.0
    %673 = vmatpush1.xpose.msra.mxu0 0.0
    %674 = vmatprep.subr.mxu0 0.0
    %675 = vmatpush1.xpose.msra.mxu0 0.0
    %676 = vmatprep.subr.mxu0 0.0
    %677 = vmatpush1.xpose.msra.mxu0 0.0
    %678 = vmatprep.subr.mxu0 0.0
    %679 = vmatpush1.xpose.msra.mxu0 0.0
    %680 = vmatprep.subr.mxu0 0.0
    %681 = vmatpush1.xpose.msra.mxu0 0.0
    %682 = vmatprep.subr.mxu0 0.0
    %683 = vmatpush1.xpose.msra.mxu0 0.0
    %684 = vmatprep.subr.mxu0 0.0
    %685 = vmatpush1.xpose.msra.mxu0 0.0
    %686 = vmatprep.subr.mxu0 0.0
    %687 = vmatpush1.xpose.msra.mxu0 0.0
    %688 = vmatprep.subr.mxu0 0.0
    %689 = vmatpush1.xpose.msra.mxu0 0.0
    %690 = vmatprep.subr.mxu0 0.0
    %691 = vmatpush1.xpose.msra.mxu0 0.0
    %692 = vmatprep.subr.mxu0 0.0
    %693 = vmatpush1.xpose.msra.mxu0 0.0
    %694 = vmatprep.subr.mxu0 0.0
    %695 = vmatpush1.xpose.msra.mxu0 0.0
    %696 = vmatprep.subr.mxu0 0.0
    %697 = vmatpush1.xpose.msra.mxu0 0.0
    %698 = vmatprep.subr.mxu0 0.0
    %699 = vmatpush1.xpose.msra.mxu0 0.0
    %700 = vmatprep.subr.mxu0 0.0
    %701 = vmatpush1.xpose.msra.mxu0 0.0
    %702 = vmatprep.subr.mxu0 0.0
    %703 = vmatpush1.xpose.msra.mxu0 0.0
    %704 = vmatprep.subr.mxu0 0.0
    %705 = vmatpush1.xpose.msra.mxu0 0.0
    %706 = vmatprep.subr.mxu0 0.0
    %707 = vmatpush1.xpose.msra.mxu0 0.0
    %708 = vmatprep.subr.mxu0 0.0
    %709 = vmatpush1.xpose.msra.mxu0 0.0
    %710 = vmatprep.subr.mxu0 0.0
    %711 = vmatpush1.xpose.msra.mxu0 0.0
    %712 = vmatprep.subr.mxu0 0.0
    %713 = vmatpush1.xpose.msra.mxu0 0.0
    %714 = vmatprep.subr.mxu0 0.0
    %715 = vmatpush1.xpose.msra.mxu0 0.0
    %716 = vmatprep.subr.mxu0 0.0
    %717 = vmatpush1.xpose.msra.mxu0 0.0
    %718 = vmatprep.subr.mxu0 0.0
    %719 = vmatpush1.xpose.msra.mxu0 0.0
    %720 = vmatprep.subr.mxu0 0.0
    %721 = vmatpush1.xpose.msra.mxu0 0.0
    %722 = vmatprep.subr.mxu0 0.0
    %723 = vmatpush1.xpose.msra.mxu0 0.0
    %724 = vmatprep.subr.mxu0 0.0
    %725 = vmatpush1.xpose.msra.mxu0 0.0
    %726 = vmatprep.mubr.f32.mxu0 0.0
    %727 = vmatmul.mubr.f32.gmra.mrb[0].mxu0 %v658
    %v728 = vpop.f32.mrb[0].mxu0
    %v729 = vadd.f32 %v35, %v728
    %v730 = vpop.f32.mrb[0].mxu0
    %731 = vdwg.mxu0
    %732 = vrot.lane.b32.xlu0 %v178, 64
    %v733 = vpop.permute.xlu0 %732
    %v734 = vsel %vm201, %v164, 0
    %v736 = vsel %vm201, %v733, 0
    %738 = vmatprep.subr.mxu0 0.0
    %739 = vmatpush1.xpose.msra.mxu0 %v736
    %740 = vmatprep.subr.mxu0 0.0
    %741 = vmatpush1.xpose.msra.mxu0 0.0
    %742 = vmatprep.subr.mxu0 0.0
    %743 = vmatpush1.xpose.msra.mxu0 0.0
    %744 = vmatprep.subr.mxu0 0.0
    %745 = vmatpush1.xpose.msra.mxu0 0.0
    %746 = vmatprep.subr.mxu0 0.0
    %747 = vmatpush1.xpose.msra.mxu0 0.0
    %748 = vmatprep.subr.mxu0 0.0
    %749 = vmatpush1.xpose.msra.mxu0 0.0
    %750 = vmatprep.subr.mxu0 0.0
    %751 = vmatpush1.xpose.msra.mxu0 0.0
    %752 = vmatprep.subr.mxu0 0.0
    %753 = vmatpush1.xpose.msra.mxu0 0.0
    %754 = vmatprep.subr.mxu0 0.0
    %755 = vmatpush1.xpose.msra.mxu0 0.0
    %756 = vmatprep.subr.mxu0 0.0
    %757 = vmatpush1.xpose.msra.mxu0 0.0
    %758 = vmatprep.subr.mxu0 0.0
    %759 = vmatpush1.xpose.msra.mxu0 0.0
    %760 = vmatprep.subr.mxu0 0.0
    %761 = vmatpush1.xpose.msra.mxu0 0.0
    %762 = vmatprep.subr.mxu0 0.0
    %763 = vmatpush1.xpose.msra.mxu0 0.0
    %764 = vmatprep.subr.mxu0 0.0
    %765 = vmatpush1.xpose.msra.mxu0 0.0
    %766 = vmatprep.subr.mxu0 0.0
    %767 = vmatpush1.xpose.msra.mxu0 0.0
    %768 = vmatprep.subr.mxu0 0.0
    %769 = vmatpush1.xpose.msra.mxu0 0.0
    %770 = vmatprep.subr.mxu0 0.0
    %771 = vmatpush1.xpose.msra.mxu0 0.0
    %772 = vmatprep.subr.mxu0 0.0
    %773 = vmatpush1.xpose.msra.mxu0 0.0
    %774 = vmatprep.subr.mxu0 0.0
    %775 = vmatpush1.xpose.msra.mxu0 0.0
    %776 = vmatprep.subr.mxu0 0.0
    %777 = vmatpush1.xpose.msra.mxu0 0.0
    %778 = vmatprep.subr.mxu0 0.0
    %779 = vmatpush1.xpose.msra.mxu0 0.0
    %780 = vmatprep.subr.mxu0 0.0
    %781 = vmatpush1.xpose.msra.mxu0 0.0
    %782 = vmatprep.subr.mxu0 0.0
    %783 = vmatpush1.xpose.msra.mxu0 0.0
    %784 = vmatprep.subr.mxu0 0.0
    %785 = vmatpush1.xpose.msra.mxu0 0.0
    %786 = vmatprep.subr.mxu0 0.0
    %787 = vmatpush1.xpose.msra.mxu0 0.0
    %788 = vmatprep.subr.mxu0 0.0
    %789 = vmatpush1.xpose.msra.mxu0 0.0
    %790 = vmatprep.subr.mxu0 0.0
    %791 = vmatpush1.xpose.msra.mxu0 0.0
    %792 = vmatprep.subr.mxu0 0.0
    %793 = vmatpush1.xpose.msra.mxu0 0.0
    %794 = vmatprep.subr.mxu0 0.0
    %795 = vmatpush1.xpose.msra.mxu0 0.0
    %796 = vmatprep.subr.mxu0 0.0
    %797 = vmatpush1.xpose.msra.mxu0 0.0
    %798 = vmatprep.subr.mxu0 0.0
    %799 = vmatpush1.xpose.msra.mxu0 0.0
    %800 = vmatprep.subr.mxu0 0.0
    %801 = vmatpush1.xpose.msra.mxu0 0.0
    %802 = vmatprep.mubr.f32.mxu0 0.0
    %803 = vmatmul.mubr.f32.gmra.mrb[0].mxu0 %v734
    %v804 = vpop.f32.mrb[0].mxu0
    %v805 = vadd.f32 %v35, %v804
    %v806 = vpop.f32.mrb[0].mxu0
    %807 = vdwg.mxu0
    %vm808 = vcmask 64512
    %v809 = vsel %vm808, %v273, -inf
    %810 = vmax.xlane.f32.xlu0 %v809
    %v811 = vpop.xlane.xlu0 %810
    %v812 = vsel %vm808, %v349, -inf
    %813 = vmax.xlane.f32.xlu0 %v812
    %v814 = vpop.xlane.xlu0 %813
    %v815 = vsel %vm808, %v425, -inf
    %816 = vmax.xlane.f32.xlu0 %v815
    %v817 = vpop.xlane.xlu0 %816
    %v818 = vsel %vm808, %v501, -inf
    %819 = vmax.xlane.f32.xlu0 %v818
    %v820 = vpop.xlane.xlu0 %819
    %v821 = vsel %vm808, %v577, -inf
    %822 = vmax.xlane.f32.xlu0 %v821
    %v823 = vpop.xlane.xlu0 %822
    %v824 = vsel %vm808, %v653, -inf
    %825 = vmax.xlane.f32.xlu0 %v824
    %v826 = vpop.xlane.xlu0 %825
    %v827 = vsel %vm808, %v729, -inf
    %828 = vmax.xlane.f32.xlu0 %v827
    %v829 = vpop.xlane.xlu0 %828
    %v830 = vsel %vm808, %v805, -inf
    %831 = vmax.xlane.f32.xlu0 %v830
    %v832 = vpop.xlane.xlu0 %831
    %v833 = vsub.f32 %v273, %v811
    %v834 = vsub.f32 %v349, %v814
    %v835 = vsub.f32 %v425, %v817
    %v836 = vsub.f32 %v501, %v820
    %v837 = vsub.f32 %v577, %v823
    %v838 = vsub.f32 %v653, %v826
    %v839 = vsub.f32 %v729, %v829
    %v840 = vsub.f32 %v805, %v832
    %v841 = vmul.f32 %v833, 1.442695
    %v842 = vpow.pop %v841
    %v843 = vmul.f32 %v834, 1.442695
    %v844 = vpow.pop %v843
    %v845 = vmul.f32 %v835, 1.442695
    %v846 = vpow.pop %v845
    %v847 = vmul.f32 %v836, 1.442695
    %v848 = vpow.pop %v847
    %v849 = vmul.f32 %v837, 1.442695
    %v850 = vpow.pop %v849
    %v851 = vmul.f32 %v838, 1.442695
    %v852 = vpow.pop %v851
    %v853 = vmul.f32 %v839, 1.442695
    %v854 = vpow.pop %v853
    %v855 = vmul.f32 %v840, 1.442695
    %v856 = vpow.pop %v855
    %v857 = vsel %vm808, %v842, 0.0
    %858 = vadd.xlane.f32.xlu0 %v857
    %v859 = vpop.xlane.xlu0 %858
    %v860 = vsel %vm808, %v844, 0.0
    %861 = vadd.xlane.f32.xlu0 %v860
    %v862 = vpop.xlane.xlu0 %861
    %v863 = vsel %vm808, %v846, 0.0
    %864 = vadd.xlane.f32.xlu0 %v863
    %v865 = vpop.xlane.xlu0 %864
    %v866 = vsel %vm808, %v848, 0.0
    %867 = vadd.xlane.f32.xlu0 %v866
    %v868 = vpop.xlane.xlu0 %867
    %v869 = vsel %vm808, %v850, 0.0
    %870 = vadd.xlane.f32.xlu0 %v869
    %v871 = vpop.xlane.xlu0 %870
    %v872 = vsel %vm808, %v852, 0.0
    %873 = vadd.xlane.f32.xlu0 %v872
    %v874 = vpop.xlane.xlu0 %873
    %v875 = vsel %vm808, %v854, 0.0
    %876 = vadd.xlane.f32.xlu0 %v875
    %v877 = vpop.xlane.xlu0 %876
    %v878 = vsel %vm808, %v856, 0.0
    %879 = vadd.xlane.f32.xlu0 %v878
    %v880 = vpop.xlane.xlu0 %879
    %v881 = vrcp.pop %v859
    %v882 = vrcp.pop %v862
    %v883 = vrcp.pop %v865
    %v884 = vrcp.pop %v868
    %v885 = vrcp.pop %v871
    %v886 = vrcp.pop %v874
    %v887 = vrcp.pop %v877
    %v888 = vrcp.pop %v880
    %v889 = vmul.f32 %v842, %v881
    %v890 = vmul.f32 %v844, %v882
    %v891 = vmul.f32 %v846, %v883
    %v892 = vmul.f32 %v848, %v884
    %v893 = vmul.f32 %v850, %v885
    %v894 = vmul.f32 %v852, %v886
    %v895 = vmul.f32 %v854, %v887
    %v896 = vmul.f32 %v856, %v888
    %v898 = vsel %vm808, %v889, 0
    %900 = vmatprep.subr.mxu0 0.0
    %901 = vmatpush1.msra.mxu0 %v141
    %902 = vmatprep.subr.mxu0 0.0
    %903 = vmatpush1.msra.mxu0 0.0
    %904 = vmatprep.subr.mxu0 0.0
    %905 = vmatpush1.msra.mxu0 0.0
    %906 = vmatprep.subr.mxu0 0.0
    %907 = vmatpush1.msra.mxu0 0.0
    %908 = vmatprep.subr.mxu0 0.0
    %909 = vmatpush1.msra.mxu0 0.0
    %910 = vmatprep.subr.mxu0 0.0
    %911 = vmatpush1.msra.mxu0 0.0
    %912 = vmatprep.subr.mxu0 0.0
    %913 = vmatpush1.msra.mxu0 0.0
    %914 = vmatprep.subr.mxu0 0.0
    %915 = vmatpush1.msra.mxu0 0.0
    %916 = vmatprep.subr.mxu0 0.0
    %917 = vmatpush1.msra.mxu0 0.0
    %918 = vmatprep.subr.mxu0 0.0
    %919 = vmatpush1.msra.mxu0 0.0
    %920 = vmatprep.subr.mxu0 0.0
    %921 = vmatpush1.msra.mxu0 0.0
    %922 = vmatprep.subr.mxu0 0.0
    %923 = vmatpush1.msra.mxu0 0.0
    %924 = vmatprep.subr.mxu0 0.0
    %925 = vmatpush1.msra.mxu0 0.0
    %926 = vmatprep.subr.mxu0 0.0
    %927 = vmatpush1.msra.mxu0 0.0
    %928 = vmatprep.subr.mxu0 0.0
    %929 = vmatpush1.msra.mxu0 0.0
    %930 = vmatprep.subr.mxu0 0.0
    %931 = vmatpush1.msra.mxu0 0.0
    %932 = vmatprep.subr.mxu0 0.0
    %933 = vmatpush1.msra.mxu0 0.0
    %934 = vmatprep.subr.mxu0 0.0
    %935 = vmatpush1.msra.mxu0 0.0
    %936 = vmatprep.subr.mxu0 0.0
    %937 = vmatpush1.msra.mxu0 0.0
    %938 = vmatprep.subr.mxu0 0.0
    %939 = vmatpush1.msra.mxu0 0.0
    %940 = vmatprep.subr.mxu0 0.0
    %941 = vmatpush1.msra.mxu0 0.0
    %942 = vmatprep.subr.mxu0 0.0
    %943 = vmatpush1.msra.mxu0 0.0
    %944 = vmatprep.subr.mxu0 0.0
    %945 = vmatpush1.msra.mxu0 0.0
    %946 = vmatprep.subr.mxu0 0.0
    %947 = vmatpush1.msra.mxu0 0.0
    %948 = vmatprep.subr.mxu0 0.0
    %949 = vmatpush1.msra.mxu0 0.0
    %950 = vmatprep.subr.mxu0 0.0
    %951 = vmatpush1.msra.mxu0 0.0
    %952 = vmatprep.subr.mxu0 0.0
    %953 = vmatpush1.msra.mxu0 0.0
    %954 = vmatprep.subr.mxu0 0.0
    %955 = vmatpush1.msra.mxu0 0.0
    %956 = vmatprep.subr.mxu0 0.0
    %957 = vmatpush1.msra.mxu0 0.0
    %958 = vmatprep.subr.mxu0 0.0
    %959 = vmatpush1.msra.mxu0 0.0
    %960 = vmatprep.subr.mxu0 0.0
    %961 = vmatpush1.msra.mxu0 0.0
    %962 = vmatprep.subr.mxu0 0.0
    %963 = vmatpush1.msra.mxu0 0.0
    %964 = vmatprep.mubr.f32.mxu0 0.0
    %965 = vmatmul.mubr.f32.gmra.mrb[0].mxu0 %v898
    %v966 = vpop.f32.mrb[0].mxu0
    %v967 = vadd.f32 0.0, %v966
    %v968 = vpop.f32.mrb[0].mxu0
    %969 = vdwg.mxu0
    %v971 = vsel %vm808, %v890, 0
    %973 = vmatprep.subr.mxu0 0.0
    %974 = vmatpush1.msra.mxu0 %v147
    %975 = vmatprep.subr.mxu0 0.0
    %976 = vmatpush1.msra.mxu0 0.0
    %977 = vmatprep.subr.mxu0 0.0
    %978 = vmatpush1.msra.mxu0 0.0
    %979 = vmatprep.subr.mxu0 0.0
    %980 = vmatpush1.msra.mxu0 0.0
    %981 = vmatprep.subr.mxu0 0.0
    %982 = vmatpush1.msra.mxu0 0.0
    %983 = vmatprep.subr.mxu0 0.0
    %984 = vmatpush1.msra.mxu0 0.0
    %985 = vmatprep.subr.mxu0 0.0
    %986 = vmatpush1.msra.mxu0 0.0
    %987 = vmatprep.subr.mxu0 0.0
    %988 = vmatpush1.msra.mxu0 0.0
    %989 = vmatprep.subr.mxu0 0.0
    %990 = vmatpush1.msra.mxu0 0.0
    %991 = vmatprep.subr.mxu0 0.0
    %992 = vmatpush1.msra.mxu0 0.0
    %993 = vmatprep.subr.mxu0 0.0
    %994 = vmatpush1.msra.mxu0 0.0
    %995 = vmatprep.subr.mxu0 0.0
    %996 = vmatpush1.msra.mxu0 0.0
    %997 = vmatprep.subr.mxu0 0.0
    %998 = vmatpush1.msra.mxu0 0.0
    %999 = vmatprep.subr.mxu0 0.0
    %1000 = vmatpush1.msra.mxu0 0.0
    %1001 = vmatprep.subr.mxu0 0.0
    %1002 = vmatpush1.msra.mxu0 0.0
    %1003 = vmatprep.subr.mxu0 0.0
    %1004 = vmatpush1.msra.mxu0 0.0
    %1005 = vmatprep.subr.mxu0 0.0
    %1006 = vmatpush1.msra.mxu0 0.0
    %1007 = vmatprep.subr.mxu0 0.0
    %1008 = vmatpush1.msra.mxu0 0.0
    %1009 = vmatprep.subr.mxu0 0.0
    %1010 = vmatpush1.msra.mxu0 0.0
    %1011 = vmatprep.subr.mxu0 0.0
    %1012 = vmatpush1.msra.mxu0 0.0
    %1013 = vmatprep.subr.mxu0 0.0
    %1014 = vmatpush1.msra.mxu0 0.0
    %1015 = vmatprep.subr.mxu0 0.0
    %1016 = vmatpush1.msra.mxu0 0.0
    %1017 = vmatprep.subr.mxu0 0.0
    %1018 = vmatpush1.msra.mxu0 0.0
    %1019 = vmatprep.subr.mxu0 0.0
    %1020 = vmatpush1.msra.mxu0 0.0
    %1021 = vmatprep.subr.mxu0 0.0
    %1022 = vmatpush1.msra.mxu0 0.0
    %1023 = vmatprep.subr.mxu0 0.0
    %1024 = vmatpush1.msra.mxu0 0.0
    %1025 = vmatprep.subr.mxu0 0.0
    %1026 = vmatpush1.msra.mxu0 0.0
    %1027 = vmatprep.subr.mxu0 0.0
    %1028 = vmatpush1.msra.mxu0 0.0
    %1029 = vmatprep.subr.mxu0 0.0
    %1030 = vmatpush1.msra.mxu0 0.0
    %1031 = vmatprep.subr.mxu0 0.0
    %1032 = vmatpush1.msra.mxu0 0.0
    %1033 = vmatprep.subr.mxu0 0.0
    %1034 = vmatpush1.msra.mxu0 0.0
    %1035 = vmatprep.subr.mxu0 0.0
    %1036 = vmatpush1.msra.mxu0 0.0
    %1037 = vmatprep.mubr.f32.mxu0 0.0
    %1038 = vmatmul.mubr.f32.gmra.mrb[0].mxu0 %v971
    %v1039 = vpop.f32.mrb[0].mxu0
    %v1040 = vadd.f32 0.0, %v1039
    %v1041 = vpop.f32.mrb[0].mxu0
    %1042 = vdwg.mxu0
    %v1044 = vsel %vm808, %v891, 0
    %1046 = vmatprep.subr.mxu0 0.0
    %1047 = vmatpush1.msra.mxu0 %v182
    %1048 = vmatprep.subr.mxu0 0.0
    %1049 = vmatpush1.msra.mxu0 0.0
    %1050 = vmatprep.subr.mxu0 0.0
    %1051 = vmatpush1.msra.mxu0 0.0
    %1052 = vmatprep.subr.mxu0 0.0
    %1053 = vmatpush1.msra.mxu0 0.0
    %1054 = vmatprep.subr.mxu0 0.0
    %1055 = vmatpush1.msra.mxu0 0.0
    %1056 = vmatprep.subr.mxu0 0.0
    %1057 = vmatpush1.msra.mxu0 0.0
    %1058 = vmatprep.subr.mxu0 0.0
    %1059 = vmatpush1.msra.mxu0 0.0
    %1060 = vmatprep.subr.mxu0 0.0
    %1061 = vmatpush1.msra.mxu0 0.0
    %1062 = vmatprep.subr.mxu0 0.0
    %1063 = vmatpush1.msra.mxu0 0.0
    %1064 = vmatprep.subr.mxu0 0.0
    %1065 = vmatpush1.msra.mxu0 0.0
    %1066 = vmatprep.subr.mxu0 0.0
    %1067 = vmatpush1.msra.mxu0 0.0
    %1068 = vmatprep.subr.mxu0 0.0
    %1069 = vmatpush1.msra.mxu0 0.0
    %1070 = vmatprep.subr.mxu0 0.0
    %1071 = vmatpush1.msra.mxu0 0.0
    %1072 = vmatprep.subr.mxu0 0.0
    %1073 = vmatpush1.msra.mxu0 0.0
    %1074 = vmatprep.subr.mxu0 0.0
    %1075 = vmatpush1.msra.mxu0 0.0
    %1076 = vmatprep.subr.mxu0 0.0
    %1077 = vmatpush1.msra.mxu0 0.0
    %1078 = vmatprep.subr.mxu0 0.0
    %1079 = vmatpush1.msra.mxu0 0.0
    %1080 = vmatprep.subr.mxu0 0.0
    %1081 = vmatpush1.msra.mxu0 0.0
    %1082 = vmatprep.subr.mxu0 0.0
    %1083 = vmatpush1.msra.mxu0 0.0
    %1084 = vmatprep.subr.mxu0 0.0
    %1085 = vmatpush1.msra.mxu0 0.0
    %1086 = vmatprep.subr.mxu0 0.0
    %1087 = vmatpush1.msra.mxu0 0.0
    %1088 = vmatprep.subr.mxu0 0.0
    %1089 = vmatpush1.msra.mxu0 0.0
    %1090 = vmatprep.subr.mxu0 0.0
    %1091 = vmatpush1.msra.mxu0 0.0
    %1092 = vmatprep.subr.mxu0 0.0
    %1093 = vmatpush1.msra.mxu0 0.0
    %1094 = vmatprep.subr.mxu0 0.0
    %1095 = vmatpush1.msra.mxu0 0.0
    %1096 = vmatprep.subr.mxu0 0.0
    %1097 = vmatpush1.msra.mxu0 0.0
    %1098 = vmatprep.subr.mxu0 0.0
    %1099 = vmatpush1.msra.mxu0 0.0
    %1100 = vmatprep.subr.mxu0 0.0
    %1101 = vmatpush1.msra.mxu0 0.0
    %1102 = vmatprep.subr.mxu0 0.0
    %1103 = vmatpush1.msra.mxu0 0.0
    %1104 = vmatprep.subr.mxu0 0.0
    %1105 = vmatpush1.msra.mxu0 0.0
    %1106 = vmatprep.subr.mxu0 0.0
    %1107 = vmatpush1.msra.mxu0 0.0
    %1108 = vmatprep.subr.mxu0 0.0
    %1109 = vmatpush1.msra.mxu0 0.0
    %1110 = vmatprep.mubr.f32.mxu0 0.0
    %1111 = vmatmul.mubr.f32.gmra.mrb[0].mxu0 %v1044
    %v1112 = vpop.f32.mrb[0].mxu0
    %v1113 = vadd.f32 0.0, %v1112
    %v1114 = vpop.f32.mrb[0].mxu0
    %1115 = vdwg.mxu0
    %v1117 = vsel %vm808, %v892, 0
    %1119 = vmatprep.subr.mxu0 0.0
    %1120 = vmatpush1.msra.mxu0 %v184
    %1121 = vmatprep.subr.mxu0 0.0
    %1122 = vmatpush1.msra.mxu0 0.0
    %1123 = vmatprep.subr.mxu0 0.0
    %1124 = vmatpush1.msra.mxu0 0.0
    %1125 = vmatprep.subr.mxu0 0.0
    %1126 = vmatpush1.msra.mxu0 0.0
    %1127 = vmatprep.subr.mxu0 0.0
    %1128 = vmatpush1.msra.mxu0 0.0
    %1129 = vmatprep.subr.mxu0 0.0
    %1130 = vmatpush1.msra.mxu0 0.0
    %1131 = vmatprep.subr.mxu0 0.0
    %1132 = vmatpush1.msra.mxu0 0.0
    %1133 = vmatprep.subr.mxu0 0.0
    %1134 = vmatpush1.msra.mxu0 0.0
    %1135 = vmatprep.subr.mxu0 0.0
    %1136 = vmatpush1.msra.mxu0 0.0
    %1137 = vmatprep.subr.mxu0 0.0
    %1138 = vmatpush1.msra.mxu0 0.0
    %1139 = vmatprep.subr.mxu0 0.0
    %1140 = vmatpush1.msra.mxu0 0.0
    %1141 = vmatprep.subr.mxu0 0.0
    %1142 = vmatpush1.msra.mxu0 0.0
    %1143 = vmatprep.subr.mxu0 0.0
    %1144 = vmatpush1.msra.mxu0 0.0
    %1145 = vmatprep.subr.mxu0 0.0
    %1146 = vmatpush1.msra.mxu0 0.0
    %1147 = vmatprep.subr.mxu0 0.0
    %1148 = vmatpush1.msra.mxu0 0.0
    %1149 = vmatprep.subr.mxu0 0.0
    %1150 = vmatpush1.msra.mxu0 0.0
    %1151 = vmatprep.subr.mxu0 0.0
    %1152 = vmatpush1.msra.mxu0 0.0
    %1153 = vmatprep.subr.mxu0 0.0
    %1154 = vmatpush1.msra.mxu0 0.0
    %1155 = vmatprep.subr.mxu0 0.0
    %1156 = vmatpush1.msra.mxu0 0.0
    %1157 = vmatprep.subr.mxu0 0.0
    %1158 = vmatpush1.msra.mxu0 0.0
    %1159 = vmatprep.subr.mxu0 0.0
    %1160 = vmatpush1.msra.mxu0 0.0
    %1161 = vmatprep.subr.mxu0 0.0
    %1162 = vmatpush1.msra.mxu0 0.0
    %1163 = vmatprep.subr.mxu0 0.0
    %1164 = vmatpush1.msra.mxu0 0.0
    %1165 = vmatprep.subr.mxu0 0.0
    %1166 = vmatpush1.msra.mxu0 0.0
    %1167 = vmatprep.subr.mxu0 0.0
    %1168 = vmatpush1.msra.mxu0 0.0
    %1169 = vmatprep.subr.mxu0 0.0
    %1170 = vmatpush1.msra.mxu0 0.0
    %1171 = vmatprep.subr.mxu0 0.0
    %1172 = vmatpush1.msra.mxu0 0.0
    %1173 = vmatprep.subr.mxu0 0.0
    %1174 = vmatpush1.msra.mxu0 0.0
    %1175 = vmatprep.subr.mxu0 0.0
    %1176 = vmatpush1.msra.mxu0 0.0
    %1177 = vmatprep.subr.mxu0 0.0
    %1178 = vmatpush1.msra.mxu0 0.0
    %1179 = vmatprep.subr.mxu0 0.0
    %1180 = vmatpush1.msra.mxu0 0.0
    %1181 = vmatprep.subr.mxu0 0.0
    %1182 = vmatpush1.msra.mxu0 0.0
    %1183 = vmatprep.mubr.f32.mxu0 0.0
    %1184 = vmatmul.mubr.f32.gmra.mrb[0].mxu0 %v1117
    %v1185 = vpop.f32.mrb[0].mxu0
    %v1186 = vadd.f32 0.0, %v1185
    %v1187 = vpop.f32.mrb[0].mxu0
    %1188 = vdwg.mxu0
    %v1190 = vsel %vm808, %v893, 0
    %1192 = vmatprep.subr.mxu0 0.0
    %1193 = vmatpush1.msra.mxu0 %v188
    %1194 = vmatprep.subr.mxu0 0.0
    %1195 = vmatpush1.msra.mxu0 0.0
    %1196 = vmatprep.subr.mxu0 0.0
    %1197 = vmatpush1.msra.mxu0 0.0
    %1198 = vmatprep.subr.mxu0 0.0
    %1199 = vmatpush1.msra.mxu0 0.0
    %1200 = vmatprep.subr.mxu0 0.0
    %1201 = vmatpush1.msra.mxu0 0.0
    %1202 = vmatprep.subr.mxu0 0.0
    %1203 = vmatpush1.msra.mxu0 0.0
    %1204 = vmatprep.subr.mxu0 0.0
    %1205 = vmatpush1.msra.mxu0 0.0
    %1206 = vmatprep.subr.mxu0 0.0
    %1207 = vmatpush1.msra.mxu0 0.0
    %1208 = vmatprep.subr.mxu0 0.0
    %1209 = vmatpush1.msra.mxu0 0.0
    %1210 = vmatprep.subr.mxu0 0.0
    %1211 = vmatpush1.msra.mxu0 0.0
    %1212 = vmatprep.subr.mxu0 0.0
    %1213 = vmatpush1.msra.mxu0 0.0
    %1214 = vmatprep.subr.mxu0 0.0
    %1215 = vmatpush1.msra.mxu0 0.0
    %1216 = vmatprep.subr.mxu0 0.0
    %1217 = vmatpush1.msra.mxu0 0.0
    %1218 = vmatprep.subr.mxu0 0.0
    %1219 = vmatpush1.msra.mxu0 0.0
    %1220 = vmatprep.subr.mxu0 0.0
    %1221 = vmatpush1.msra.mxu0 0.0
    %1222 = vmatprep.subr.mxu0 0.0
    %1223 = vmatpush1.msra.mxu0 0.0
    %1224 = vmatprep.subr.mxu0 0.0
    %1225 = vmatpush1.msra.mxu0 0.0
    %1226 = vmatprep.subr.mxu0 0.0
    %1227 = vmatpush1.msra.mxu0 0.0
    %1228 = vmatprep.subr.mxu0 0.0
    %1229 = vmatpush1.msra.mxu0 0.0
    %1230 = vmatprep.subr.mxu0 0.0
    %1231 = vmatpush1.msra.mxu0 0.0
    %1232 = vmatprep.subr.mxu0 0.0
    %1233 = vmatpush1.msra.mxu0 0.0
    %1234 = vmatprep.subr.mxu0 0.0
    %1235 = vmatpush1.msra.mxu0 0.0
    %1236 = vmatprep.subr.mxu0 0.0
    %1237 = vmatpush1.msra.mxu0 0.0
    %1238 = vmatprep.subr.mxu0 0.0
    %1239 = vmatpush1.msra.mxu0 0.0
    %1240 = vmatprep.subr.mxu0 0.0
    %1241 = vmatpush1.msra.mxu0 0.0
    %1242 = vmatprep.subr.mxu0 0.0
    %1243 = vmatpush1.msra.mxu0 0.0
    %1244 = vmatprep.subr.mxu0 0.0
    %1245 = vmatpush1.msra.mxu0 0.0
    %1246 = vmatprep.subr.mxu0 0.0
    %1247 = vmatpush1.msra.mxu0 0.0
    %1248 = vmatprep.subr.mxu0 0.0
    %1249 = vmatpush1.msra.mxu0 0.0
    %1250 = vmatprep.subr.mxu0 0.0
    %1251 = vmatpush1.msra.mxu0 0.0
    %1252 = vmatprep.subr.mxu0 0.0
    %1253 = vmatpush1.msra.mxu0 0.0
    %1254 = vmatprep.subr.mxu0 0.0
    %1255 = vmatpush1.msra.mxu0 0.0
    %1256 = vmatprep.mubr.f32.mxu0 0.0
    %1257 = vmatmul.mubr.f32.gmra.mrb[0].mxu0 %v1190
    %v1258 = vpop.f32.mrb[0].mxu0
    %v1259 = vadd.f32 0.0, %v1258
    %v1260 = vpop.f32.mrb[0].mxu0
    %1261 = vdwg.mxu0
    %v1263 = vsel %vm808, %v894, 0
    %1265 = vmatprep.subr.mxu0 0.0
    %1266 = vmatpush1.msra.mxu0 %v190
    %1267 = vmatprep.subr.mxu0 0.0
    %1268 = vmatpush1.msra.mxu0 0.0
    %1269 = vmatprep.subr.mxu0 0.0
    %1270 = vmatpush1.msra.mxu0 0.0
    %1271 = vmatprep.subr.mxu0 0.0
    %1272 = vmatpush1.msra.mxu0 0.0
    %1273 = vmatprep.subr.mxu0 0.0
    %1274 = vmatpush1.msra.mxu0 0.0
    %1275 = vmatprep.subr.mxu0 0.0
    %1276 = vmatpush1.msra.mxu0 0.0
    %1277 = vmatprep.subr.mxu0 0.0
    %1278 = vmatpush1.msra.mxu0 0.0
    %1279 = vmatprep.subr.mxu0 0.0
    %1280 = vmatpush1.msra.mxu0 0.0
    %1281 = vmatprep.subr.mxu0 0.0
    %1282 = vmatpush1.msra.mxu0 0.0
    %1283 = vmatprep.subr.mxu0 0.0
    %1284 = vmatpush1.msra.mxu0 0.0
    %1285 = vmatprep.subr.mxu0 0.0
    %1286 = vmatpush1.msra.mxu0 0.0
    %1287 = vmatprep.subr.mxu0 0.0
    %1288 = vmatpush1.msra.mxu0 0.0
    %1289 = vmatprep.subr.mxu0 0.0
    %1290 = vmatpush1.msra.mxu0 0.0
    %1291 = vmatprep.subr.mxu0 0.0
    %1292 = vmatpush1.msra.mxu0 0.0
    %1293 = vmatprep.subr.mxu0 0.0
    %1294 = vmatpush1.msra.mxu0 0.0
    %1295 = vmatprep.subr.mxu0 0.0
    %1296 = vmatpush1.msra.mxu0 0.0
    %1297 = vmatprep.subr.mxu0 0.0
    %1298 = vmatpush1.msra.mxu0 0.0
    %1299 = vmatprep.subr.mxu0 0.0
    %1300 = vmatpush1.msra.mxu0 0.0
    %1301 = vmatprep.subr.mxu0 0.0
    %1302 = vmatpush1.msra.mxu0 0.0
    %1303 = vmatprep.subr.mxu0 0.0
    %1304 = vmatpush1.msra.mxu0 0.0
    %1305 = vmatprep.subr.mxu0 0.0
    %1306 = vmatpush1.msra.mxu0 0.0
    %1307 = vmatprep.subr.mxu0 0.0
    %1308 = vmatpush1.msra.mxu0 0.0
    %1309 = vmatprep.subr.mxu0 0.0
    %1310 = vmatpush1.msra.mxu0 0.0
    %1311 = vmatprep.subr.mxu0 0.0
    %1312 = vmatpush1.msra.mxu0 0.0
    %1313 = vmatprep.subr.mxu0 0.0
    %1314 = vmatpush1.msra.mxu0 0.0
    %1315 = vmatprep.subr.mxu0 0.0
    %1316 = vmatpush1.msra.mxu0 0.0
    %1317 = vmatprep.subr.mxu0 0.0
    %1318 = vmatpush1.msra.mxu0 0.0
    %1319 = vmatprep.subr.mxu0 0.0
    %1320 = vmatpush1.msra.mxu0 0.0
    %1321 = vmatprep.subr.mxu0 0.0
    %1322 = vmatpush1.msra.mxu0 0.0
    %1323 = vmatprep.subr.mxu0 0.0
    %1324 = vmatpush1.msra.mxu0 0.0
    %1325 = vmatprep.subr.mxu0 0.0
    %1326 = vmatpush1.msra.mxu0 0.0
    %1327 = vmatprep.subr.mxu0 0.0
    %1328 = vmatpush1.msra.mxu0 0.0
    %1329 = vmatprep.mubr.f32.mxu0 0.0
    %1330 = vmatmul.mubr.f32.gmra.mrb[0].mxu0 %v1263
    %v1331 = vpop.f32.mrb[0].mxu0
    %v1332 = vadd.f32 0.0, %v1331
    %v1333 = vpop.f32.mrb[0].mxu0
    %1334 = vdwg.mxu0
    %v1336 = vsel %vm808, %v895, 0
    %1338 = vmatprep.subr.mxu0 0.0
    %1339 = vmatpush1.msra.mxu0 %v194
    %1340 = vmatprep.subr.mxu0 0.0
    %1341 = vmatpush1.msra.mxu0 0.0
    %1342 = vmatprep.subr.mxu0 0.0
    %1343 = vmatpush1.msra.mxu0 0.0
    %1344 = vmatprep.subr.mxu0 0.0
    %1345 = vmatpush1.msra.mxu0 0.0
    %1346 = vmatprep.subr.mxu0 0.0
    %1347 = vmatpush1.msra.mxu0 0.0
    %1348 = vmatprep.subr.mxu0 0.0
    %1349 = vmatpush1.msra.mxu0 0.0
    %1350 = vmatprep.subr.mxu0 0.0
    %1351 = vmatpush1.msra.mxu0 0.0
    %1352 = vmatprep.subr.mxu0 0.0
    %1353 = vmatpush1.msra.mxu0 0.0
    %1354 = vmatprep.subr.mxu0 0.0
    %1355 = vmatpush1.msra.mxu0 0.0
    %1356 = vmatprep.subr.mxu0 0.0
    %1357 = vmatpush1.msra.mxu0 0.0
    %1358 = vmatprep.subr.mxu0 0.0
    %1359 = vmatpush1.msra.mxu0 0.0
    %1360 = vmatprep.subr.mxu0 0.0
    %1361 = vmatpush1.msra.mxu0 0.0
    %1362 = vmatprep.subr.mxu0 0.0
    %1363 = vmatpush1.msra.mxu0 0.0
    %1364 = vmatprep.subr.mxu0 0.0
    %1365 = vmatpush1.msra.mxu0 0.0
    %1366 = vmatprep.subr.mxu0 0.0
    %1367 = vmatpush1.msra.mxu0 0.0
    %1368 = vmatprep.subr.mxu0 0.0
    %1369 = vmatpush1.msra.mxu0 0.0
    %1370 = vmatprep.subr.mxu0 0.0
    %1371 = vmatpush1.msra.mxu0 0.0
    %1372 = vmatprep.subr.mxu0 0.0
    %1373 = vmatpush1.msra.mxu0 0.0
    %1374 = vmatprep.subr.mxu0 0.0
    %1375 = vmatpush1.msra.mxu0 0.0
    %1376 = vmatprep.subr.mxu0 0.0
    %1377 = vmatpush1.msra.mxu0 0.0
    %1378 = vmatprep.subr.mxu0 0.0
    %1379 = vmatpush1.msra.mxu0 0.0
    %1380 = vmatprep.subr.mxu0 0.0
    %1381 = vmatpush1.msra.mxu0 0.0
    %1382 = vmatprep.subr.mxu0 0.0
    %1383 = vmatpush1.msra.mxu0 0.0
    %1384 = vmatprep.subr.mxu0 0.0
    %1385 = vmatpush1.msra.mxu0 0.0
    %1386 = vmatprep.subr.mxu0 0.0
    %1387 = vmatpush1.msra.mxu0 0.0
    %1388 = vmatprep.subr.mxu0 0.0
    %1389 = vmatpush1.msra.mxu0 0.0
    %1390 = vmatprep.subr.mxu0 0.0
    %1391 = vmatpush1.msra.mxu0 0.0
    %1392 = vmatprep.subr.mxu0 0.0
    %1393 = vmatpush1.msra.mxu0 0.0
    %1394 = vmatprep.subr.mxu0 0.0
    %1395 = vmatpush1.msra.mxu0 0.0
    %1396 = vmatprep.subr.mxu0 0.0
    %1397 = vmatpush1.msra.mxu0 0.0
    %1398 = vmatprep.subr.mxu0 0.0
    %1399 = vmatpush1.msra.mxu0 0.0
    %1400 = vmatprep.subr.mxu0 0.0
    %1401 = vmatpush1.msra.mxu0 0.0
    %1402 = vmatprep.mubr.f32.mxu0 0.0
    %1403 = vmatmul.mubr.f32.gmra.mrb[0].mxu0 %v1336
    %v1404 = vpop.f32.mrb[0].mxu0
    %v1405 = vadd.f32 0.0, %v1404
    %v1406 = vpop.f32.mrb[0].mxu0
    %1407 = vdwg.mxu0
    %v1409 = vsel %vm808, %v896, 0
    %1411 = vmatprep.subr.mxu0 0.0
    %1412 = vmatpush1.msra.mxu0 %v196
    %1413 = vmatprep.subr.mxu0 0.0
    %1414 = vmatpush1.msra.mxu0 0.0
    %1415 = vmatprep.subr.mxu0 0.0
    %1416 = vmatpush1.msra.mxu0 0.0
    %1417 = vmatprep.subr.mxu0 0.0
    %1418 = vmatpush1.msra.mxu0 0.0
    %1419 = vmatprep.subr.mxu0 0.0
    %1420 = vmatpush1.msra.mxu0 0.0
    %1421 = vmatprep.subr.mxu0 0.0
    %1422 = vmatpush1.msra.mxu0 0.0
    %1423 = vmatprep.subr.mxu0 0.0
    %1424 = vmatpush1.msra.mxu0 0.0
    %1425 = vmatprep.subr.mxu0 0.0
    %1426 = vmatpush1.msra.mxu0 0.0
    %1427 = vmatprep.subr.mxu0 0.0
    %1428 = vmatpush1.msra.mxu0 0.0
    %1429 = vmatprep.subr.mxu0 0.0
    %1430 = vmatpush1.msra.mxu0 0.0
    %1431 = vmatprep.subr.mxu0 0.0
    %1432 = vmatpush1.msra.mxu0 0.0
    %1433 = vmatprep.subr.mxu0 0.0
    %1434 = vmatpush1.msra.mxu0 0.0
    %1435 = vmatprep.subr.mxu0 0.0
    %1436 = vmatpush1.msra.mxu0 0.0
    %1437 = vmatprep.subr.mxu0 0.0
    %1438 = vmatpush1.msra.mxu0 0.0
    %1439 = vmatprep.subr.mxu0 0.0
    %1440 = vmatpush1.msra.mxu0 0.0
    %1441 = vmatprep.subr.mxu0 0.0
    %1442 = vmatpush1.msra.mxu0 0.0
    %1443 = vmatprep.subr.mxu0 0.0
    %1444 = vmatpush1.msra.mxu0 0.0
    %1445 = vmatprep.subr.mxu0 0.0
    %1446 = vmatpush1.msra.mxu0 0.0
    %1447 = vmatprep.subr.mxu0 0.0
    %1448 = vmatpush1.msra.mxu0 0.0
    %1449 = vmatprep.subr.mxu0 0.0
    %1450 = vmatpush1.msra.mxu0 0.0
    %1451 = vmatprep.subr.mxu0 0.0
    %1452 = vmatpush1.msra.mxu0 0.0
    %1453 = vmatprep.subr.mxu0 0.0
    %1454 = vmatpush1.msra.mxu0 0.0
    %1455 = vmatprep.subr.mxu0 0.0
    %1456 = vmatpush1.msra.mxu0 0.0
    %1457 = vmatprep.subr.mxu0 0.0
    %1458 = vmatpush1.msra.mxu0 0.0
    %1459 = vmatprep.subr.mxu0 0.0
    %1460 = vmatpush1.msra.mxu0 0.0
    %1461 = vmatprep.subr.mxu0 0.0
    %1462 = vmatpush1.msra.mxu0 0.0
    %1463 = vmatprep.subr.mxu0 0.0
    %1464 = vmatpush1.msra.mxu0 0.0
    %1465 = vmatprep.subr.mxu0 0.0
    %1466 = vmatpush1.msra.mxu0 0.0
    %1467 = vmatprep.subr.mxu0 0.0
    %1468 = vmatpush1.msra.mxu0 0.0
    %1469 = vmatprep.subr.mxu0 0.0
    %1470 = vmatpush1.msra.mxu0 0.0
    %1471 = vmatprep.subr.mxu0 0.0
    %1472 = vmatpush1.msra.mxu0 0.0
    %1473 = vmatprep.subr.mxu0 0.0
    %1474 = vmatpush1.msra.mxu0 0.0
    %1475 = vmatprep.mubr.f32.mxu0 0.0
    %1476 = vmatmul.mubr.f32.gmra.mrb[0].mxu0 %v1409
    %v1477 = vpop.f32.mrb[0].mxu0
    %v1478 = vadd.f32 0.0, %v1477
    %v1479 = vpop.f32.mrb[0].mxu0
    %1480 = vdwg.mxu0
    %1483 = vrot.lane.b32.xlu0 %v1113, 16
    %v1484 = vpop.permute.xlu0 %1483
    %1485 = vrot.lane.b32.xlu0 %v1186, 16
    %v1486 = vpop.permute.xlu0 %1485
    %1491 = vrot.lane.b32.xlu0 %v1259, 32
    %v1492 = vpop.permute.xlu0 %1491
    %1493 = vrot.lane.b32.xlu0 %v1332, 32
    %v1494 = vpop.permute.xlu0 %1493
    %1499 = vrot.lane.b32.xlu0 %v1405, 48
    %v1500 = vpop.permute.xlu0 %1499
    %1501 = vrot.lane.b32.xlu0 %v1478, 48
    %v1502 = vpop.permute.xlu0 %1501
    %v1505 = vsel %vm201, %v967, %v1484
    %v1506 = vsel %vm201, %v1040, %v1486
    %vm1507 = vcmask 261120
    %v1508 = vsel %vm1507, %v1505, %v1492
    %v1509 = vsel %vm1507, %v1506, %v1494
    %vm1510 = vcmask 392192
    %v1511 = vsel %vm1510, %v1508, %v1500
    %v1512 = vsel %vm1510, %v1509, %v1502
    %v1513 = vld [vmem:[%s4] sm:$0xff]
    %v1514 = vld [vmem:[%s4 + $0x8] sm:$0xff]
    %v1515 = vld [vmem:[%s4 + $0x10] sm:$0xff]
    %v1516 = vld [vmem:[%s4 + $0x18] sm:$0xff]
    %v1517 = vld [vmem:[%s4 + $0x20] sm:$0xff]
    %v1518 = vld [vmem:[%s4 + $0x28] sm:$0xff]
    %v1519 = vld [vmem:[%s4 + $0x30] sm:$0xff]
    %v1520 = vld [vmem:[%s4 + $0x38] sm:$0xff]
    %v1521 = vlaneseq
    %v1522 = vshrl.u32 %v1521, 7
    %v1523 = vsub.s32 0, %v1522
    %v1524 = vrot.slane %v36, %v1523
    %v1526 = vsel %vm65, %v1511, 0
    %v1529 = vsel %vm65, %v1512, 0
    %1531 = vmatprep.subr.mxu0 0.0
    %1532 = vmatpush1.msra.mxu0 %v1513
    %1533 = vmatprep.subr.mxu0 0.0
    %1534 = vmatpush1.msra.mxu0 %v1514
    %1535 = vmatprep.subr.mxu0 0.0
    %1536 = vmatpush1.msra.mxu0 %v1515
    %1537 = vmatprep.subr.mxu0 0.0
    %1538 = vmatpush1.msra.mxu0 %v1516
    %1539 = vmatprep.subr.mxu0 0.0
    %1540 = vmatpush1.msra.mxu0 %v1517
    %1541 = vmatprep.subr.mxu0 0.0
    %1542 = vmatpush1.msra.mxu0 %v1518
    %1543 = vmatprep.subr.mxu0 0.0
    %1544 = vmatpush1.msra.mxu0 %v1519
    %1545 = vmatprep.subr.mxu0 0.0
    %1546 = vmatpush1.msra.mxu0 %v1520
    %1547 = vmatprep.subr.mxu0 0.0
    %1548 = vmatpush1.msra.mxu0 0.0
    %1549 = vmatprep.subr.mxu0 0.0
    %1550 = vmatpush1.msra.mxu0 0.0
    %1551 = vmatprep.subr.mxu0 0.0
    %1552 = vmatpush1.msra.mxu0 0.0
    %1553 = vmatprep.subr.mxu0 0.0
    %1554 = vmatpush1.msra.mxu0 0.0
    %1555 = vmatprep.subr.mxu0 0.0
    %1556 = vmatpush1.msra.mxu0 0.0
    %1557 = vmatprep.subr.mxu0 0.0
    %1558 = vmatpush1.msra.mxu0 0.0
    %1559 = vmatprep.subr.mxu0 0.0
    %1560 = vmatpush1.msra.mxu0 0.0
    %1561 = vmatprep.subr.mxu0 0.0
    %1562 = vmatpush1.msra.mxu0 0.0
    %1563 = vmatprep.subr.mxu0 0.0
    %1564 = vmatpush1.msra.mxu0 0.0
    %1565 = vmatprep.subr.mxu0 0.0
    %1566 = vmatpush1.msra.mxu0 0.0
    %1567 = vmatprep.subr.mxu0 0.0
    %1568 = vmatpush1.msra.mxu0 0.0
    %1569 = vmatprep.subr.mxu0 0.0
    %1570 = vmatpush1.msra.mxu0 0.0
    %1571 = vmatprep.subr.mxu0 0.0
    %1572 = vmatpush1.msra.mxu0 0.0
    %1573 = vmatprep.subr.mxu0 0.0
    %1574 = vmatpush1.msra.mxu0 0.0
    %1575 = vmatprep.subr.mxu0 0.0
    %1576 = vmatpush1.msra.mxu0 0.0
    %1577 = vmatprep.subr.mxu0 0.0
    %1578 = vmatpush1.msra.mxu0 0.0
    %1579 = vmatprep.subr.mxu0 0.0
    %1580 = vmatpush1.msra.mxu0 0.0
    %1581 = vmatprep.subr.mxu0 0.0
    %1582 = vmatpush1.msra.mxu0 0.0
    %1583 = vmatprep.subr.mxu0 0.0
    %1584 = vmatpush1.msra.mxu0 0.0
    %1585 = vmatprep.subr.mxu0 0.0
    %1586 = vmatpush1.msra.mxu0 0.0
    %1587 = vmatprep.subr.mxu0 0.0
    %1588 = vmatpush1.msra.mxu0 0.0
    %1589 = vmatprep.subr.mxu0 0.0
    %1590 = vmatpush1.msra.mxu0 0.0
    %1591 = vmatprep.subr.mxu0 0.0
    %1592 = vmatpush1.msra.mxu0 0.0
    %1593 = vmatprep.subr.mxu0 0.0
    %1594 = vmatpush1.msra.mxu0 0.0
    %1595 = vmatprep.mubr.f32.mxu0 0.0
    %1596 = vmatmul.mubr.f32.gmra.mrb[0].mxu0 %v1526
    %v1597 = vpop.f32.mrb[0].mxu0
    %v1598 = vadd.f32 %v1524, %v1597
    %v1599 = vpop.f32.mrb[0].mxu0
    %1600 = vmatprep.mubr.f32.mxu0 0.0
    %1601 = vmatmul.mubr.f32.gmra.mrb[0].mxu0 %v1529
    %v1602 = vpop.f32.mrb[0].mxu0
    %v1603 = vadd.f32 %v1524, %v1602
    %v1604 = vpop.f32.mrb[0].mxu0
    %1605 = vdwg.mxu0
    %v1606 = vadd.f32 %v33, %v1598
    %v1607 = vadd.f32 %v34, %v1603
    %v1608 = vsel %vm65, %v1606, 0.0
    %1609 = vadd.xlane.f32.xlu0 %v1608
    %v1610 = vpop.xlane.xlu0 %1609
    %v1611 = vsel %vm65, %v1607, 0.0
    %1612 = vadd.xlane.f32.xlu0 %v1611
    %v1613 = vpop.xlane.xlu0 %1612
    %v1614 = vrcp.pop 64.0
    %v1615 = vmul.f32 %v1610, %v1614
    %v1616 = vmul.f32 %v1613, %v1614
    %v1617 = vsub.f32 %v1606, %v1615
    %v1618 = vsub.f32 %v1607, %v1616
    %v1619 = vmul.f32 %v1617, %v1617
    %v1620 = vmul.f32 %v1618, %v1618
    %v1621 = vsel %vm65, %v1619, 0.0
    %1622 = vadd.xlane.f32.xlu0 %v1621
    %v1623 = vpop.xlane.xlu0 %1622
    %v1624 = vsel %vm65, %v1620, 0.0
    %1625 = vadd.xlane.f32.xlu0 %v1624
    %v1626 = vpop.xlane.xlu0 %1625
    %v1627 = vmul.f32 %v1623, %v1614
    %v1628 = vmul.f32 %v1626, %v1614
    %v1629 = vadd.f32 %v1627, 1e-05
    %v1630 = vadd.f32 %v1628, 1e-05
    %v1631 = vrsqrt.pop %v1629
    %v1632 = vrsqrt.pop %v1630
    %v1633 = vmul.f32 %v1617, %v1631
    %v1634 = vmul.f32 %v1618, %v1632
    %v1635 = vlaneseq
    %v1636 = vshrl.u32 %v1635, 7
    %v1637 = vsub.s32 2, %v1636
    %v1638 = vrot.slane %v36, %v1637
    %v1639 = vmul.f32 %v1633, %v1638
    %v1640 = vmul.f32 %v1634, %v1638
    %v1641 = vlaneseq
    %v1642 = vshrl.u32 %v1641, 7
    %v1643 = vsub.s32 3, %v1642
    %v1644 = vrot.slane %v36, %v1643
    %v1645 = vadd.f32 %v1639, %v1644
    %v1646 = vadd.f32 %v1640, %v1644
    %v1647 = vld [vmem:[%s5] sm:$0xff]
    %v1648 = vld [vmem:[%s5 + $0x8] sm:$0xff]
    %v1649 = vld [vmem:[%s5 + $0x10] sm:$0xff]
    %v1650 = vld [vmem:[%s5 + $0x18] sm:$0xff]
    %v1651 = vld [vmem:[%s5 + $0x20] sm:$0xff]
    %v1652 = vld [vmem:[%s5 + $0x28] sm:$0xff]
    %v1653 = vld [vmem:[%s5 + $0x30] sm:$0xff]
    %v1654 = vld [vmem:[%s5 + $0x38] sm:$0xff]
    %v1655 = vld [vmem:[%s5 + $0x40] sm:$0xff]
    %v1656 = vld [vmem:[%s5 + $0x48] sm:$0xff]
    %v1657 = vld [vmem:[%s5 + $0x50] sm:$0xff]
    %v1658 = vld [vmem:[%s5 + $0x58] sm:$0xff]
    %v1659 = vld [vmem:[%s5 + $0x60] sm:$0xff]
    %v1660 = vld [vmem:[%s5 + $0x68] sm:$0xff]
    %v1661 = vld [vmem:[%s5 + $0x70] sm:$0xff]
    %v1662 = vld [vmem:[%s5 + $0x78] sm:$0xff]
    %v1663 = vld [vmem:[%s6] sm:$0x3]
    %v1665 = vlaneseq
    %v1666 = vshrl.u32 %v1665, 7
    %v1667 = vsub.s32 0, %v1666
    %v1668 = vrot.slane %v1663, %v1667
    %v1669 = vlaneseq
    %v1670 = vshrl.u32 %v1669, 7
    %v1671 = vsub.s32 1, %v1670
    %v1672 = vrot.slane %v1663, %v1671
    %v1676 = vsel %vm65, %v1645, 0
    %v1679 = vsel %vm65, %v1646, 0
    %1681 = vmatprep.subr.mxu0 %v1648
    %1682 = vmatpush1.msra.mxu0 %v1647
    %1683 = vmatprep.subr.mxu0 %v1650
    %1684 = vmatpush1.msra.mxu0 %v1649
    %1685 = vmatprep.subr.mxu0 %v1652
    %1686 = vmatpush1.msra.mxu0 %v1651
    %1687 = vmatprep.subr.mxu0 %v1654
    %1688 = vmatpush1.msra.mxu0 %v1653
    %1689 = vmatprep.subr.mxu0 %v1656
    %1690 = vmatpush1.msra.mxu0 %v1655
    %1691 = vmatprep.subr.mxu0 %v1658
    %1692 = vmatpush1.msra.mxu0 %v1657
    %1693 = vmatprep.subr.mxu0 %v1660
    %1694 = vmatpush1.msra.mxu0 %v1659
    %1695 = vmatprep.subr.mxu0 %v1662
    %1696 = vmatpush1.msra.mxu0 %v1661
    %1697 = vmatprep.subr.mxu0 0.0
    %1698 = vmatpush1.msra.mxu0 0.0
    %1699 = vmatprep.subr.mxu0 0.0
    %1700 = vmatpush1.msra.mxu0 0.0
    %1701 = vmatprep.subr.mxu0 0.0
    %1702 = vmatpush1.msra.mxu0 0.0
    %1703 = vmatprep.subr.mxu0 0.0
    %1704 = vmatpush1.msra.mxu0 0.0
    %1705 = vmatprep.subr.mxu0 0.0
    %1706 = vmatpush1.msra.mxu0 0.0
    %1707 = vmatprep.subr.mxu0 0.0
    %1708 = vmatpush1.msra.mxu0 0.0
    %1709 = vmatprep.subr.mxu0 0.0
    %1710 = vmatpush1.msra.mxu0 0.0
    %1711 = vmatprep.subr.mxu0 0.0
    %1712 = vmatpush1.msra.mxu0 0.0
    %1713 = vmatprep.subr.mxu0 0.0
    %1714 = vmatpush1.msra.mxu0 0.0
    %1715 = vmatprep.subr.mxu0 0.0
    %1716 = vmatpush1.msra.mxu0 0.0
    %1717 = vmatprep.subr.mxu0 0.0
    %1718 = vmatpush1.msra.mxu0 0.0
    %1719 = vmatprep.subr.mxu0 0.0
    %1720 = vmatpush1.msra.mxu0 0.0
    %1721 = vmatprep.subr.mxu0 0.0
    %1722 = vmatpush1.msra.mxu0 0.0
    %1723 = vmatprep.subr.mxu0 0.0
    %1724 = vmatpush1.msra.mxu0 0.0
    %1725 = vmatprep.subr.mxu0 0.0
    %1726 = vmatpush1.msra.mxu0 0.0
    %1727 = vmatprep.subr.mxu0 0.0
    %1728 = vmatpush1.msra.mxu0 0.0
    %1729 = vmatprep.subr.mxu0 0.0
    %1730 = vmatpush1.msra.mxu0 0.0
    %1731 = vmatprep.subr.mxu0 0.0
    %1732 = vmatpush1.msra.mxu0 0.0
    %1733 = vmatprep.subr.mxu0 0.0
    %1734 = vmatpush1.msra.mxu0 0.0
    %1735 = vmatprep.subr.mxu0 0.0
    %1736 = vmatpush1.msra.mxu0 0.0
    %1737 = vmatprep.subr.mxu0 0.0
    %1738 = vmatpush1.msra.mxu0 0.0
    %1739 = vmatprep.subr.mxu0 0.0
    %1740 = vmatpush1.msra.mxu0 0.0
    %1741 = vmatprep.subr.mxu0 0.0
    %1742 = vmatpush1.msra.mxu0 0.0
    %1743 = vmatprep.subr.mxu0 0.0
    %1744 = vmatpush1.msra.mxu0 0.0
    %1745 = vmatprep.mubr.f32.mxu0 0.0
    %1746 = vmatmul.mubr.f32.gmra.mrb[0].mxu0 %v1676
    %v1747 = vpop.f32.mrb[0].mxu0
    %v1748 = vadd.f32 %v1668, %v1747
    %v1749 = vpop.f32.mrb[0].mxu0
    %v1750 = vadd.f32 %v1672, %v1749
    %1751 = vmatprep.mubr.f32.mxu0 0.0
    %1752 = vmatmul.mubr.f32.gmra.mrb[0].mxu0 %v1679
    %v1753 = vpop.f32.mrb[0].mxu0
    %v1754 = vadd.f32 %v1668, %v1753
    %v1755 = vpop.f32.mrb[0].mxu0
    %v1756 = vadd.f32 %v1672, %v1755
    %1757 = vdwg.mxu0
    %v1758 = vmax.f32 %v1748, 0.0
    %v1759 = vmax.f32 %v1750, 0.0
    %v1760 = vmax.f32 %v1754, 0.0
    %v1761 = vmax.f32 %v1756, 0.0
    %v1762 = vld [vmem:[%s7] sm:$0xff]
    %v1763 = vld [vmem:[%s7 + $0x8] sm:$0xff]
    %v1764 = vld [vmem:[%s7 + $0x10] sm:$0xff]
    %v1765 = vld [vmem:[%s7 + $0x18] sm:$0xff]
    %v1766 = vld [vmem:[%s7 + $0x20] sm:$0xff]
    %v1767 = vld [vmem:[%s7 + $0x28] sm:$0xff]
    %v1768 = vld [vmem:[%s7 + $0x30] sm:$0xff]
    %v1769 = vld [vmem:[%s7 + $0x38] sm:$0xff]
    %v1770 = vld [vmem:[%s7 + $0x40] sm:$0xff]
    %v1771 = vld [vmem:[%s7 + $0x48] sm:$0xff]
    %v1772 = vld [vmem:[%s7 + $0x50] sm:$0xff]
    %v1773 = vld [vmem:[%s7 + $0x58] sm:$0xff]
    %v1774 = vld [vmem:[%s7 + $0x60] sm:$0xff]
    %v1775 = vld [vmem:[%s7 + $0x68] sm:$0xff]
    %v1776 = vld [vmem:[%s7 + $0x70] sm:$0xff]
    %v1777 = vld [vmem:[%s7 + $0x78] sm:$0xff]
    %v1778 = vld [vmem:[%s7 + $0x80] sm:$0xff]
    %v1779 = vld [vmem:[%s7 + $0x88] sm:$0xff]
    %v1780 = vld [vmem:[%s7 + $0x90] sm:$0xff]
    %v1781 = vld [vmem:[%s7 + $0x98] sm:$0xff]
    %v1782 = vld [vmem:[%s7 + $0xa0] sm:$0xff]
    %v1783 = vld [vmem:[%s7 + $0xa8] sm:$0xff]
    %v1784 = vld [vmem:[%s7 + $0xb0] sm:$0xff]
    %v1785 = vld [vmem:[%s7 + $0xb8] sm:$0xff]
    %v1786 = vld [vmem:[%s7 + $0xc0] sm:$0xff]
    %v1787 = vld [vmem:[%s7 + $0xc8] sm:$0xff]
    %v1788 = vld [vmem:[%s7 + $0xd0] sm:$0xff]
    %v1789 = vld [vmem:[%s7 + $0xd8] sm:$0xff]
    %v1790 = vld [vmem:[%s7 + $0xe0] sm:$0xff]
    %v1791 = vld [vmem:[%s7 + $0xe8] sm:$0xff]
    %v1792 = vld [vmem:[%s7 + $0xf0] sm:$0xff]
    %v1793 = vld [vmem:[%s7 + $0xf8] sm:$0xff]
    %v1794 = vlaneseq
    %v1795 = vshrl.u32 %v1794, 7
    %v1796 = vsub.s32 1, %v1795
    %v1797 = vrot.slane %v36, %v1796
    %1798 = vmatprep.subr.mxu0 0.0
    %1799 = vmatpush1.msra.mxu0 %v1762
    %1800 = vmatprep.subr.mxu0 0.0
    %1801 = vmatpush1.msra.mxu0 %v1763
    %1802 = vmatprep.subr.mxu0 0.0
    %1803 = vmatpush1.msra.mxu0 %v1764
    %1804 = vmatprep.subr.mxu0 0.0
    %1805 = vmatpush1.msra.mxu0 %v1765
    %1806 = vmatprep.subr.mxu0 0.0
    %1807 = vmatpush1.msra.mxu0 %v1766
    %1808 = vmatprep.subr.mxu0 0.0
    %1809 = vmatpush1.msra.mxu0 %v1767
    %1810 = vmatprep.subr.mxu0 0.0
    %1811 = vmatpush1.msra.mxu0 %v1768
    %1812 = vmatprep.subr.mxu0 0.0
    %1813 = vmatpush1.msra.mxu0 %v1769
    %1814 = vmatprep.subr.mxu0 0.0
    %1815 = vmatpush1.msra.mxu0 %v1770
    %1816 = vmatprep.subr.mxu0 0.0
    %1817 = vmatpush1.msra.mxu0 %v1771
    %1818 = vmatprep.subr.mxu0 0.0
    %1819 = vmatpush1.msra.mxu0 %v1772
    %1820 = vmatprep.subr.mxu0 0.0
    %1821 = vmatpush1.msra.mxu0 %v1773
    %1822 = vmatprep.subr.mxu0 0.0
    %1823 = vmatpush1.msra.mxu0 %v1774
    %1824 = vmatprep.subr.mxu0 0.0
    %1825 = vmatpush1.msra.mxu0 %v1775
    %1826 = vmatprep.subr.mxu0 0.0
    %1827 = vmatpush1.msra.mxu0 %v1776
    %1828 = vmatprep.subr.mxu0 0.0
    %1829 = vmatpush1.msra.mxu0 %v1777
    %1830 = vmatprep.subr.mxu0 0.0
    %1831 = vmatpush1.msra.mxu0 %v1778
    %1832 = vmatprep.subr.mxu0 0.0
    %1833 = vmatpush1.msra.mxu0 %v1779
    %1834 = vmatprep.subr.mxu0 0.0
    %1835 = vmatpush1.msra.mxu0 %v1780
    %1836 = vmatprep.subr.mxu0 0.0
    %1837 = vmatpush1.msra.mxu0 %v1781
    %1838 = vmatprep.subr.mxu0 0.0
    %1839 = vmatpush1.msra.mxu0 %v1782
    %1840 = vmatprep.subr.mxu0 0.0
    %1841 = vmatpush1.msra.mxu0 %v1783
    %1842 = vmatprep.subr.mxu0 0.0
    %1843 = vmatpush1.msra.mxu0 %v1784
    %1844 = vmatprep.subr.mxu0 0.0
    %1845 = vmatpush1.msra.mxu0 %v1785
    %1846 = vmatprep.subr.mxu0 0.0
    %1847 = vmatpush1.msra.mxu0 %v1786
    %1848 = vmatprep.subr.mxu0 0.0
    %1849 = vmatpush1.msra.mxu0 %v1787
    %1850 = vmatprep.subr.mxu0 0.0
    %1851 = vmatpush1.msra.mxu0 %v1788
    %1852 = vmatprep.subr.mxu0 0.0
    %1853 = vmatpush1.msra.mxu0 %v1789
    %1854 = vmatprep.subr.mxu0 0.0
    %1855 = vmatpush1.msra.mxu0 %v1790
    %1856 = vmatprep.subr.mxu0 0.0
    %1857 = vmatpush1.msra.mxu0 %v1791
    %1858 = vmatprep.subr.mxu0 0.0
    %1859 = vmatpush1.msra.mxu0 %v1792
    %1860 = vmatprep.subr.mxu0 0.0
    %1861 = vmatpush1.msra.mxu0 %v1793
    %1862 = vmatprep.mubr.f32.mxu0 %v1759
    %1863 = vmatmul.mubr.f32.gmra.mrb[0].mxu0 %v1758
    %v1864 = vpop.f32.mrb[0].mxu0
    %v1865 = vadd.f32 %v1797, %v1864
    %v1866 = vpop.f32.mrb[0].mxu0
    %1867 = vmatprep.mubr.f32.mxu0 %v1761
    %1868 = vmatmul.mubr.f32.gmra.mrb[0].mxu0 %v1760
    %v1869 = vpop.f32.mrb[0].mxu0
    %v1870 = vadd.f32 %v1797, %v1869
    %v1871 = vpop.f32.mrb[0].mxu0
    %1872 = vdwg.mxu0
    %v1873 = vadd.f32 %v1645, %v1865
    %v1874 = vadd.f32 %v1646, %v1870
    %v1875 = vsel %vm65, %v1873, 0.0
    %1876 = vadd.xlane.f32.xlu0 %v1875
    %v1877 = vpop.xlane.xlu0 %1876
    %v1878 = vsel %vm65, %v1874, 0.0
    %1879 = vadd.xlane.f32.xlu0 %v1878
    %v1880 = vpop.xlane.xlu0 %1879
    %v1881 = vmul.f32 %v1877, %v1614
    %v1882 = vmul.f32 %v1880, %v1614
    %v1883 = vsub.f32 %v1873, %v1881
    %v1884 = vsub.f32 %v1874, %v1882
    %v1885 = vmul.f32 %v1883, %v1883
    %v1886 = vmul.f32 %v1884, %v1884
    %v1887 = vsel %vm65, %v1885, 0.0
    %1888 = vadd.xlane.f32.xlu0 %v1887
    %v1889 = vpop.xlane.xlu0 %1888
    %v1890 = vsel %vm65, %v1886, 0.0
    %1891 = vadd.xlane.f32.xlu0 %v1890
    %v1892 = vpop.xlane.xlu0 %1891
    %v1893 = vmul.f32 %v1889, %v1614
    %v1894 = vmul.f32 %v1892, %v1614
    %v1895 = vadd.f32 %v1893, 1e-05
    %v1896 = vadd.f32 %v1894, 1e-05
    %v1897 = vrsqrt.pop %v1895
    %v1898 = vrsqrt.pop %v1896
    %v1899 = vmul.f32 %v1883, %v1897
    %v1900 = vmul.f32 %v1884, %v1898
    %v1901 = vlaneseq
    %v1902 = vshrl.u32 %v1901, 7
    %v1903 = vsub.s32 4, %v1902
    %v1904 = vrot.slane %v36, %v1903
    %v1905 = vmul.f32 %v1899, %v1904
    %v1906 = vmul.f32 %v1900, %v1904
    %v1907 = vlaneseq
    %v1908 = vshrl.u32 %v1907, 7
    %v1909 = vsub.s32 5, %v1908
    %v1910 = vrot.slane %v36, %v1909
    %v1911 = vadd.f32 %v1905, %v1910
    %v1912 = vadd.f32 %v1906, %v1910
    %1913 = vst.msk [vmem:[#allocation2] sm:$0xff] %vm65, %v1911
    %1914 = vst.msk [vmem:[#allocation2 + $0x8] sm:$0xff] %vm65, %v1912
    // Predicated region
    $region38: #{tpu_custom_call.1} parent=1 // pred_check
      _
    $region39: #{tpu_custom_call.1} parent=1 // pred_check_branch
      %1916 = sbr.rel (0) target = $region41
    $region40: #{tpu_custom_call.1} parent=1 // pred_region
      %s1918 = ssub.s32 256, 256
      %1919 = vsyncadd [#allocation3], %s1918
      %s1920 = sshll.u32 [#allocation2], 4
      %s1921 = int_to_ptr.vmem [resolvable:$true] %s1920
      %1926 = dma.vmem_to_hbm [thread:$0]  %s1921, 256, %s9, [#allocation3], 128, 128, 8
    $region41: #{tpu_custom_call.1} parent=1 // pred_fallthru
      _
    // Predicated region
    $region42: #{tpu_custom_call.1} parent=1 // pred_check
      _
    $region43: #{tpu_custom_call.1} parent=1 // pred_check_branch
      %1928 = sbr.rel (0) target = $region45
    $region44: #{tpu_custom_call.1} parent=1 // pred_region
      %1929 = dma.done [#allocation3], 256
    $region45: #{tpu_custom_call.1} parent=1 // pred_fallthru
      _
    %1930 = vsyncpa [#allocation3], 1

</llo_original>
